<compile_context>
chip_gen: v7x
topology: tpu7x:2x2x1
jax: 0.10.0
libtpu: 0.0.40
codegen_flags: <defaults>
</compile_context>

<pallas_src>
from functools import partial

import jax
import jax.numpy as jnp
from jax.experimental import pallas as pl
from jax.experimental.pallas import tpu as pltpu


def self_attn_kernel(x_ref, gamma_ref, beta_ref, wqkv_ref, bqkv_ref, o_ref, *,
                     batch, seq_len, head_num, head_channels):
    N, L, H, D = batch, seq_len, head_num, head_channels
    C = H * D

    x = x_ref[...].astype(jnp.float32)                         # (N*L, C)

    # --- LayerNorm (eps=1e-5, biased variance, affine); all elementwise in f32 ---
    mean = jnp.mean(x, axis=-1, keepdims=True)
    var = jnp.mean(jnp.square(x - mean), axis=-1, keepdims=True)
    xn = (x - mean) * jax.lax.rsqrt(var + 1e-5)
    xn = xn * gamma_ref[...] + beta_ref[...]                    # (N*L, C)

    # --- fused q/k/v projection: ONE bf16 MXU matmul over all N*L rows, f32
    #     accumulation.  Softmax scale D**-0.5 is pre-folded into the q columns. ---
    qkv = jnp.dot(xn.astype(jnp.bfloat16), wqkv_ref[...],
                  preferred_element_type=jnp.float32) + bqkv_ref[...]   # (N*L, 3C) f32
    qkv = qkv.astype(jnp.bfloat16)

    # --- single head-split relayout for the whole fused tensor.
    #     Column index of qkv is proj*C + h*D + d, so the middle axis below is
    #     the fused (proj, head) axis of size 3*H; one einshape moves it in
    #     front (one XLU relayout instead of three). ---
    qkv_h = pltpu.einshape("lhd->hld", qkv.reshape(N * L, 3 * H, D))    # (3H, N*L, D)
    # Leading/sublane-aligned regroup: batch index becomes (proj*H + h)*N + n.
    qkv_b = qkv_h.reshape(3 * H * N, L, D)
    q_b = qkv_b[:H * N]                                          # (H*N, L, D) bf16
    k_b = qkv_b[H * N:2 * H * N]
    v_b = qkv_b[2 * H * N:]

    # --- batched scaled-dot-product attention over all heads and batch items
    #     at once (scale pre-folded); scores/softmax in f32. ---
    s = jnp.einsum('bld,bmd->blm', q_b, k_b,
                   preferred_element_type=jnp.float32)           # (H*N, L, L) f32
    s = s - jnp.max(s, axis=-1, keepdims=True)
    p = jnp.exp(s)
    p = p * pl.reciprocal(jnp.sum(p, axis=-1, keepdims=True), approx=True)

    o = jnp.einsum('blm,bmd->bld', p.astype(jnp.bfloat16), v_b,
                   preferred_element_type=jnp.float32)           # (H*N, L, D) f32

    # --- merge heads back to (N*L, C): out[n*L+l, h*D+d] = o[h*N+n, l, d] ---
    o = o.reshape(H, N * L, D)                                   # layout-compatible regroup
    o = pltpu.einshape("hld->lhd", o).reshape(N * L, C)

    # proj_out == Identity (inner == in_channels), Dropout(p=0) == Identity;
    # residual add with the pre-norm shortcut.
    o_ref[...] = (o + x).astype(o_ref.dtype)


def prepare_params(params, *, head_channels):
    """One-time parameter fusion (hoisted out of the forward pass)."""
    gamma, beta, wq, bq, wk, bk, wv, bv = params
    scale = float(head_channels) ** -0.5
    wqkv = jnp.concatenate([wq * scale, wk, wv], axis=1).astype(jnp.bfloat16)   # (C, 3C)
    bqkv = jnp.concatenate([bq * scale, bk, bv], axis=1).astype(jnp.float32)    # (1, 3C)
    return (gamma.astype(jnp.float32), beta.astype(jnp.float32), wqkv, bqkv)


@partial(jax.jit, static_argnames=("head_num", "head_channels"))
def self_attn(x, fused_params, *, head_num, head_channels):
    gamma, beta, wqkv, bqkv = fused_params
    N, L, C = x.shape
    inner = head_num * head_channels
    assert inner == C, "this config uses Identity proj_out (inner == in_channels)"

    kernel = partial(self_attn_kernel, batch=N, seq_len=L,
                     head_num=head_num, head_channels=head_channels)

    # Single kernel invocation (grid == ()): whole arrays live in VMEM, no
    # per-grid-step overhead, no per-step DMA descriptor setup.  At these
    # shapes (a few KiB total) this is far below any VMEM limit.
    out = pl.pallas_call(
        kernel,
        out_shape=jax.ShapeDtypeStruct((N * L, C), x.dtype),
    )(x.reshape(N * L, C), gamma, beta, wqkv, bqkv)

    # Row-major contiguous reshape back to [N, L, C] (no data movement).
    return out.reshape(N, L, C)


def reference(x, params, *, head_num, head_channels):
    gamma, beta, wq, bq, wk, bk, wv, bv = params
    N, L, C = x.shape
    D = head_channels
    mean = jnp.mean(x, axis=-1, keepdims=True)
    var = jnp.mean((x - mean) ** 2, axis=-1, keepdims=True)
    xn = (x - mean) * jax.lax.rsqrt(var + 1e-5) * gamma + beta
    q = (xn @ wq + bq).reshape(N, L, head_num, D).transpose(0, 2, 1, 3)
    k = (xn @ wk + bk).reshape(N, L, head_num, D).transpose(0, 2, 3, 1)
    v = (xn @ wv + bv).reshape(N, L, head_num, D).transpose(0, 2, 1, 3)
    attn = jax.nn.softmax((q @ k) * (D ** -0.5), axis=-1)
    o = (attn @ v).transpose(0, 2, 1, 3).reshape(N, L, head_num * D)
    return o + x


if __name__ == "__main__":
    # Small shapes consistent with the module's [N, L, C] forward.
    N, L, C = 2, 16, 32
    head_num, head_channels = 4, 8          # inner = 32 == C  -> proj_out = Identity

    key = jax.random.PRNGKey(0)
    kx, kq, kk, kv, kbq, kbk, kbv = jax.random.split(key, 7)

    x = jax.random.normal(kx, (N, L, C), dtype=jnp.float32)

    inner = head_num * head_channels
    gamma = jnp.ones((1, C), jnp.float32)   # nn.LayerNorm default init
    beta = jnp.zeros((1, C), jnp.float32)
    wq = jax.random.normal(kq, (C, inner), jnp.float32) * 0.05
    wk = jax.random.normal(kk, (C, inner), jnp.float32) * 0.05
    wv = jax.random.normal(kv, (C, inner), jnp.float32) * 0.05
    bq = jax.random.normal(kbq, (1, inner), jnp.float32) * 0.05
    bk = jax.random.normal(kbk, (1, inner), jnp.float32) * 0.05
    bv = jax.random.normal(kbv, (1, inner), jnp.float32) * 0.05
    params = (gamma, beta, wq, bq, wk, bk, wv, bv)

    # Weight fusion done ONCE at setup time (hoisted out of the forward).
    fused_params = prepare_params(params, head_channels=head_channels)
    fused_params = jax.block_until_ready(fused_params)

    out = self_attn(x, fused_params, head_num=head_num, head_channels=head_channels)
    out = jax.block_until_ready(out)

    ref = reference(x, params, head_num=head_num, head_channels=head_channels)
    assert out.shape == (N, L, C)
    # bf16 MXU operands + approx reciprocal -> looser tolerance than pure f32.
    assert jnp.allclose(out, ref, atol=2e-2, rtol=2e-2), "mismatch vs JAX reference"

    print("KERNEL_OK")
</pallas_src>

<mosaic_0001>
module attributes {stable_mosaic.version = 11 : i64} {
  func.func @self_attn_kernel(%arg0: memref<32x32xf32, #tpu.memory_space<vmem>>, %arg1: memref<1x32xf32, #tpu.memory_space<vmem>>, %arg2: memref<1x32xf32, #tpu.memory_space<vmem>>, %arg3: memref<32x96xbf16, #tpu.memory_space<vmem>>, %arg4: memref<1x96xf32, #tpu.memory_space<vmem>>, %arg5: memref<32x32xf32, #tpu.memory_space<vmem>>) attributes {dimension_semantics = [], scalar_prefetch = 0 : i64, scratch_operands = 0 : i64, tpu.core_type = #tpu.core_type<tc>} {
    %c0 = arith.constant 0 : index
    %c0_0 = arith.constant 0 : index
    %0 = vector.load %arg0[%c0, %c0_0] : memref<32x32xf32, #tpu.memory_space<vmem>>, vector<32x32xf32>
    %cst = arith.constant dense<0.000000e+00> : vector<32xf32>
    %1 = vector.multi_reduction <add>, %0, %cst [1] : vector<32x32xf32> to vector<32xf32>
    %2 = vector.shape_cast %1 : vector<32xf32> to vector<32x1xf32>
    %cst_1 = arith.constant 3.200000e+01 : f32
    %3 = vector.broadcast %cst_1 : f32 to vector<32x1xf32>
    %4 = arith.divf %2, %3 : vector<32x1xf32>
    %5 = vector.broadcast %4 : vector<32x1xf32> to vector<32x32xf32>
    %6 = arith.subf %0, %5 : vector<32x32xf32>
    %7 = arith.mulf %6, %6 : vector<32x32xf32>
    %cst_2 = arith.constant dense<0.000000e+00> : vector<32xf32>
    %8 = vector.multi_reduction <add>, %7, %cst_2 [1] : vector<32x32xf32> to vector<32xf32>
    %9 = vector.shape_cast %8 : vector<32xf32> to vector<32x1xf32>
    %cst_3 = arith.constant 3.200000e+01 : f32
    %10 = vector.broadcast %cst_3 : f32 to vector<32x1xf32>
    %11 = arith.divf %9, %10 : vector<32x1xf32>
    %12 = vector.broadcast %4 : vector<32x1xf32> to vector<32x32xf32>
    %13 = arith.subf %0, %12 : vector<32x32xf32>
    %cst_4 = arith.constant 9.99999974E-6 : f32
    %14 = vector.broadcast %cst_4 : f32 to vector<32x1xf32>
    %15 = arith.addf %11, %14 : vector<32x1xf32>
    %16 = math.rsqrt %15 : vector<32x1xf32>
    %17 = vector.broadcast %16 : vector<32x1xf32> to vector<32x32xf32>
    %18 = arith.mulf %13, %17 : vector<32x32xf32>
    %c0_5 = arith.constant 0 : index
    %c0_6 = arith.constant 0 : index
    %19 = vector.load %arg1[%c0_5, %c0_6] : memref<1x32xf32, #tpu.memory_space<vmem>>, vector<1x32xf32>
    %20 = vector.broadcast %19 : vector<1x32xf32> to vector<32x32xf32>
    %21 = arith.mulf %18, %20 : vector<32x32xf32>
    %c0_7 = arith.constant 0 : index
    %c0_8 = arith.constant 0 : index
    %22 = vector.load %arg2[%c0_7, %c0_8] : memref<1x32xf32, #tpu.memory_space<vmem>>, vector<1x32xf32>
    %23 = vector.broadcast %22 : vector<1x32xf32> to vector<32x32xf32>
    %24 = arith.addf %21, %23 : vector<32x32xf32>
    %25 = arith.truncf %24 : vector<32x32xf32> to vector<32x32xbf16>
    %c0_9 = arith.constant 0 : index
    %c0_10 = arith.constant 0 : index
    %26 = vector.load %arg3[%c0_9, %c0_10] : memref<32x96xbf16, #tpu.memory_space<vmem>>, vector<32x96xbf16>
    %cst_11 = arith.constant dense<0.000000e+00> : vector<32x96xf32>
    %27 = tpu.matmul %25, %26, %cst_11 {dimension_numbers = #tpu.dot_dimension_numbers<[1], [0], [0], [1], [0, 0, 1, 1], [], []>} : vector<32x32xbf16>, vector<32x96xbf16>, vector<32x96xf32> -> vector<32x96xf32>
    %c0_12 = arith.constant 0 : index
    %c0_13 = arith.constant 0 : index
    %28 = vector.load %arg4[%c0_12, %c0_13] : memref<1x96xf32, #tpu.memory_space<vmem>>, vector<1x96xf32>
    %29 = vector.broadcast %28 : vector<1x96xf32> to vector<32x96xf32>
    %30 = arith.addf %27, %29 : vector<32x96xf32>
    %31 = arith.truncf %30 : vector<32x96xf32> to vector<32x96xbf16>
    %32 = vector.shape_cast %31 : vector<32x96xbf16> to vector<32x12x8xbf16>
    %33 = tpu.transpose %32, [1, 0, 2] : vector<32x12x8xbf16> -> vector<12x32x8xbf16>
    %34 = vector.shape_cast %33 : vector<12x32x8xbf16> to vector<24x16x8xbf16>
    %35 = vector.extract_strided_slice %34 {offsets = [0, 0, 0], sizes = [8, 16, 8], strides = [1, 1, 1]} : vector<24x16x8xbf16> to vector<8x16x8xbf16>
    %36 = vector.extract_strided_slice %34 {offsets = [8, 0, 0], sizes = [8, 16, 8], strides = [1, 1, 1]} : vector<24x16x8xbf16> to vector<8x16x8xbf16>
    %37 = vector.extract_strided_slice %34 {offsets = [16, 0, 0], sizes = [8, 16, 8], strides = [1, 1, 1]} : vector<24x16x8xbf16> to vector<8x16x8xbf16>
    "tpu.trace_start"() <{level = 10 : i32, message = "bld,bmd->blm"}> : () -> ()
    %cst_14 = arith.constant dense<0.000000e+00> : vector<8x16x16xf32>
    %38 = tpu.matmul %35, %36, %cst_14 {dimension_numbers = #tpu.dot_dimension_numbers<[2], [2], [1], [1], [0, 0, 0, 1, 1, 1], [0], [0]>} : vector<8x16x8xbf16>, vector<8x16x8xbf16>, vector<8x16x16xf32> -> vector<8x16x16xf32>
    "tpu.trace_stop"() : () -> ()
    %cst_15 = arith.constant dense<0xFF800000> : vector<8x16xf32>
    %39 = vector.multi_reduction <maximumf>, %38, %cst_15 [2] : vector<8x16x16xf32> to vector<8x16xf32>
    %40 = vector.shape_cast %39 : vector<8x16xf32> to vector<8x16x1xf32>
    %41 = vector.broadcast %40 : vector<8x16x1xf32> to vector<8x16x16xf32>
    %42 = arith.subf %38, %41 : vector<8x16x16xf32>
    %43 = math.exp %42 : vector<8x16x16xf32>
    %cst_16 = arith.constant dense<0.000000e+00> : vector<8x16xf32>
    %44 = vector.multi_reduction <add>, %43, %cst_16 [2] : vector<8x16x16xf32> to vector<8x16xf32>
    %45 = vector.shape_cast %44 : vector<8x16xf32> to vector<8x16x1xf32>
    %46 = tpu.reciprocal %45 {approx = true} : vector<8x16x1xf32> -> vector<8x16x1xf32>
    %47 = vector.broadcast %46 : vector<8x16x1xf32> to vector<8x16x16xf32>
    %48 = arith.mulf %43, %47 : vector<8x16x16xf32>
    %49 = arith.truncf %48 : vector<8x16x16xf32> to vector<8x16x16xbf16>
    "tpu.trace_start"() <{level = 10 : i32, message = "blm,bmd->bld"}> : () -> ()
    %cst_17 = arith.constant dense<0.000000e+00> : vector<8x16x8xf32>
    %50 = tpu.matmul %49, %37, %cst_17 {dimension_numbers = #tpu.dot_dimension_numbers<[2], [1], [1], [2], [0, 0, 0, 1, 1, 2], [0], [0]>} : vector<8x16x16xbf16>, vector<8x16x8xbf16>, vector<8x16x8xf32> -> vector<8x16x8xf32>
    "tpu.trace_stop"() : () -> ()
    %51 = vector.shape_cast %50 : vector<8x16x8xf32> to vector<4x32x8xf32>
    %52 = tpu.transpose %51, [1, 0, 2] : vector<4x32x8xf32> -> vector<32x4x8xf32>
    %53 = vector.shape_cast %52 : vector<32x4x8xf32> to vector<32x32xf32>
    %54 = arith.addf %53, %0 : vector<32x32xf32>
    %c0_18 = arith.constant 0 : index
    %c0_19 = arith.constant 0 : index
    %55 = vector.load %arg5[%c0_18, %c0_19] : memref<32x32xf32, #tpu.memory_space<vmem>>, vector<32x32xf32>
    tpu.vector_store %arg5[%c0_18, %c0_19], %54 {strides = array<i32>} : memref<32x32xf32, #tpu.memory_space<vmem>>, vector<32x32xf32>,
    return
  }
}

</mosaic_0001>

<llo_original>
// kernel: self_attn.1
$region0: #{self_attn.1}
  #allocation0 [shape = 'u32[]', space=smem, size = 0x4, offset = 0x4, fixed_abs, tag = 'smem constant byte address 0x4 - core index']
  #allocation1 [shape = 'u32[144,128]{1,0:T(1,128)}', space=vmem, size = 0x12000, scoped, tag = 'internal scratch']
  %s0 = inlined_call_operand.hbm [shape: f32[32,32], index: 0, kind: input, shape index: {}]
  %s1 = inlined_call_operand.vmem [shape: f32[1,32], index: 1, kind: input, shape index: {}]
  %s2 = inlined_call_operand.vmem [shape: f32[1,32], index: 2, kind: input, shape index: {}]
  %s3 = inlined_call_operand.hbm [shape: bf16[32,96], index: 3, kind: input, shape index: {}]
  %s4 = inlined_call_operand.vmem [shape: f32[1,96], index: 4, kind: input, shape index: {}]
  %s5 = inlined_call_operand.hbm [shape: f32[32,32], index: 5, kind: output, shape index: {}]
  %s6 = sld [smem:[#allocation0]]
  $region38: #{self_attn.1} parent=0
    _
  %s8 = ssub.s32 1, %s6
  %s9 = scalar_select 0, %s8, %s6
  $region1: #{self_attn.1} parent=0
    #allocation2 [shape = 'u8[16384]{0}', space=vmem, size = 0x4000, scoped, tag = 'input window, operand 0, single buffered']
    #allocation3 [shape = 's32[1]{0}', space=sflag, size = 0x4, scoped, tag = 'scoped memory for self_attn.1']
    #allocation4 [shape = 's32[1]{0}', space=sflag, size = 0x4, scoped, tag = 'scoped memory for self_attn.1']
    #allocation5 [shape = 'u8[8192]{0}', space=vmem, size = 0x2000, scoped, tag = 'input window, operand 3, single buffered']
    #allocation6 [shape = 's32[1]{0}', space=sflag, size = 0x4, scoped, tag = 'scoped memory for self_attn.1']
    #allocation7 [shape = 'u8[16384]{0}', space=vmem, size = 0x4000, scoped, tag = 'output window, operand 0, single buffered']
    %10 = vsyncpa [#allocation3], 0
    %11 = vsyncpa [#allocation6], 0
    %12 = vsyncpa [#allocation4], 0
    // Predicated region
    $region2: #{self_attn.1} parent=1 // pred_check
      _
    $region3: #{self_attn.1} parent=1 // pred_check_branch
      %14 = sbr.rel (0) target = $region5
    $region4: #{self_attn.1} parent=1 // pred_region
      %s16 = ssub.s32 512, 512
      %17 = vsyncadd [#allocation3], %s16
      %s18 = sshll.u32 [#allocation2], 4
      %s19 = int_to_ptr.vmem [resolvable:$true] %s18
      %24 = dma.hbm_to_vmem [thread:$0]  %s0, 512, %s19, [#allocation3], 128, 128, 8
    $region5: #{self_attn.1} parent=1 // pred_fallthru
      _
    // Predicated region
    $region6: #{self_attn.1} parent=1 // pred_check
      _
    $region7: #{self_attn.1} parent=1 // pred_check_branch
      %26 = sbr.rel (0) target = $region9
    $region8: #{self_attn.1} parent=1 // pred_region
      _
    $region9: #{self_attn.1} parent=1 // pred_fallthru
      _
    // Predicated region
    $region10: #{self_attn.1} parent=1 // pred_check
      _
    $region11: #{self_attn.1} parent=1 // pred_check_branch
      %28 = sbr.rel (0) target = $region13
    $region12: #{self_attn.1} parent=1 // pred_region
      _
    $region13: #{self_attn.1} parent=1 // pred_fallthru
      _
    // Predicated region
    $region14: #{self_attn.1} parent=1 // pred_check
      _
    $region15: #{self_attn.1} parent=1 // pred_check_branch
      %30 = sbr.rel (0) target = $region17
    $region16: #{self_attn.1} parent=1 // pred_region
      %s32 = ssub.s32 256, 256
      %33 = vsyncadd [#allocation6], %s32
      %s34 = sshll.u32 [#allocation5], 4
      %s35 = int_to_ptr.vmem [resolvable:$true] %s34
      %40 = dma.hbm_to_vmem [thread:$0]  %s3, 256, %s35, [#allocation6], 64, 64, 4
    $region17: #{self_attn.1} parent=1 // pred_fallthru
      _
    // Predicated region
    $region18: #{self_attn.1} parent=1 // pred_check
      _
    $region19: #{self_attn.1} parent=1 // pred_check_branch
      %42 = sbr.rel (0) target = $region21
    $region20: #{self_attn.1} parent=1 // pred_region
      _
    $region21: #{self_attn.1} parent=1 // pred_fallthru
      _
    // Predicated region
    $region22: #{self_attn.1} parent=1 // pred_check
      _
    $region23: #{self_attn.1} parent=1 // pred_check_branch
      %44 = sbr.rel (0) target = $region25
    $region24: #{self_attn.1} parent=1 // pred_region
      %45 = dma.done [#allocation3], 512
    $region25: #{self_attn.1} parent=1 // pred_fallthru
      _
    // Predicated region
    $region26: #{self_attn.1} parent=1 // pred_check
      _
    $region27: #{self_attn.1} parent=1 // pred_check_branch
      %47 = sbr.rel (0) target = $region29
    $region28: #{self_attn.1} parent=1 // pred_region
      %48 = dma.done [#allocation6], 256
    $region29: #{self_attn.1} parent=1 // pred_fallthru
      _
    %v50 = vld [vmem:[#allocation2] sm:$0xff]
    %v51 = vld [vmem:[#allocation2 + $0x8] sm:$0xff]
    %v52 = vld [vmem:[#allocation2 + $0x10] sm:$0xff]
    %v53 = vld [vmem:[#allocation2 + $0x18] sm:$0xff]
    %vm54 = vcmask 261120
    %v55 = vsel %vm54, %v50, 0.0
    %56 = vadd.xlane.f32.xlu0 %v55
    %v57 = vpop.xlane.xlu0 %56
    %v58 = vsel %vm54, %v51, 0.0
    %59 = vadd.xlane.f32.xlu0 %v58
    %v60 = vpop.xlane.xlu0 %59
    %v61 = vsel %vm54, %v52, 0.0
    %62 = vadd.xlane.f32.xlu0 %v61
    %v63 = vpop.xlane.xlu0 %62
    %v64 = vsel %vm54, %v53, 0.0
    %65 = vadd.xlane.f32.xlu0 %v64
    %v66 = vpop.xlane.xlu0 %65
    %v67 = vrcp.pop 32.0
    %v68 = vmul.f32 %v57, %v67
    %v69 = vmul.f32 %v60, %v67
    %v70 = vmul.f32 %v63, %v67
    %v71 = vmul.f32 %v66, %v67
    %v72 = vsub.f32 %v50, %v68
    %v73 = vsub.f32 %v51, %v69
    %v74 = vsub.f32 %v52, %v70
    %v75 = vsub.f32 %v53, %v71
    %v76 = vmul.f32 %v72, %v72
    %v77 = vmul.f32 %v73, %v73
    %v78 = vmul.f32 %v74, %v74
    %v79 = vmul.f32 %v75, %v75
    %v80 = vsel %vm54, %v76, 0.0
    %81 = vadd.xlane.f32.xlu0 %v80
    %v82 = vpop.xlane.xlu0 %81
    %v83 = vsel %vm54, %v77, 0.0
    %84 = vadd.xlane.f32.xlu0 %v83
    %v85 = vpop.xlane.xlu0 %84
    %v86 = vsel %vm54, %v78, 0.0
    %87 = vadd.xlane.f32.xlu0 %v86
    %v88 = vpop.xlane.xlu0 %87
    %v89 = vsel %vm54, %v79, 0.0
    %90 = vadd.xlane.f32.xlu0 %v89
    %v91 = vpop.xlane.xlu0 %90
    %v92 = vmul.f32 %v82, %v67
    %v93 = vmul.f32 %v85, %v67
    %v94 = vmul.f32 %v88, %v67
    %v95 = vmul.f32 %v91, %v67
    %v96 = vadd.f32 %v92, 1e-05
    %v97 = vadd.f32 %v93, 1e-05
    %v98 = vadd.f32 %v94, 1e-05
    %v99 = vadd.f32 %v95, 1e-05
    %v100 = vrsqrt.pop %v96
    %v101 = vrsqrt.pop %v97
    %v102 = vrsqrt.pop %v98
    %v103 = vrsqrt.pop %v99
    %v104 = vmul.f32 %v72, %v100
    %v105 = vmul.f32 %v73, %v101
    %v106 = vmul.f32 %v74, %v102
    %v107 = vmul.f32 %v75, %v103
    %v108 = vld [vmem:[%s1] sm:$0x1]
    %v110 = vlaneseq
    %v111 = vshrl.u32 %v110, 7
    %v112 = vsub.s32 0, %v111
    %v113 = vrot.slane %v108, %v112
    %v115 = vmul.f32 %v104, %v113
    %v116 = vmul.f32 %v105, %v113
    %v117 = vmul.f32 %v106, %v113
    %v118 = vmul.f32 %v107, %v113
    %v119 = vld [vmem:[%s2] sm:$0x1]
    %v121 = vlaneseq
    %v122 = vshrl.u32 %v121, 7
    %v123 = vsub.s32 0, %v122
    %v124 = vrot.slane %v119, %v123
    %v126 = vadd.f32 %v115, %v124
    %v127 = vadd.f32 %v116, %v124
    %v128 = vadd.f32 %v117, %v124
    %v129 = vadd.f32 %v118, %v124
    %v130 = vpack.c.bf16 %v127, %v126
    %v131 = vpack.c.bf16 %v129, %v128
    %v132 = vld [vmem:[#allocation5] sm:$0xf]
    %v133 = vld [vmem:[#allocation5 + $0x4] sm:$0xf]
    %v134 = vld [vmem:[#allocation5 + $0x8] sm:$0xf]
    %v135 = vld [vmem:[#allocation5 + $0xc] sm:$0xf]
    %v136 = vld [vmem:[%s4] sm:$0x1]
    %v138 = vlaneseq
    %v139 = vshrl.u32 %v138, 7
    %v140 = vsub.s32 0, %v139
    %v141 = vrot.slane %v136, %v140
    %v147 = vunpack.c.l.b16 %v132
    %v148 = vunpack.c.l.b16 %v133
    %v149 = vunpack.c.l.b16 %v134
    %v150 = vunpack.c.l.b16 %v135
    %v151 = vpack.c.b16 %v148, %v147
    %v152 = vpack.c.b16 %v150, %v149
    %v156 = vsel %vm54, %v130, 0
    %v159 = vsel %vm54, %v131, 0
    %161 = vmatprep.subr.bf16.mxu0 0
    %162 = vmatpush1.bf16.msra.mxu0 %v151
    %163 = vmatprep.subr.bf16.mxu0 0
    %164 = vmatpush1.bf16.msra.mxu0 %v152
    %165 = vmatprep.subr.bf16.mxu0 0
    %166 = vmatpush1.bf16.msra.mxu0 0
    %167 = vmatprep.subr.bf16.mxu0 0
    %168 = vmatpush1.bf16.msra.mxu0 0
    %169 = vmatprep.subr.bf16.mxu0 0
    %170 = vmatpush1.bf16.msra.mxu0 0
    %171 = vmatprep.subr.bf16.mxu0 0
    %172 = vmatpush1.bf16.msra.mxu0 0
    %173 = vmatprep.subr.bf16.mxu0 0
    %174 = vmatpush1.bf16.msra.mxu0 0
    %175 = vmatprep.subr.bf16.mxu0 0
    %176 = vmatpush1.bf16.msra.mxu0 0
    %177 = vmatprep.subr.bf16.mxu0 0
    %178 = vmatpush1.bf16.msra.mxu0 0
    %179 = vmatprep.subr.bf16.mxu0 0
    %180 = vmatpush1.bf16.msra.mxu0 0
    %181 = vmatprep.subr.bf16.mxu0 0
    %182 = vmatpush1.bf16.msra.mxu0 0
    %183 = vmatprep.subr.bf16.mxu0 0
    %184 = vmatpush1.bf16.msra.mxu0 0
    %185 = vmatprep.subr.bf16.mxu0 0
    %186 = vmatpush1.bf16.msra.mxu0 0
    %187 = vmatprep.subr.bf16.mxu0 0
    %188 = vmatpush1.bf16.msra.mxu0 0
    %189 = vmatprep.subr.bf16.mxu0 0
    %190 = vmatpush1.bf16.msra.mxu0 0
    %191 = vmatprep.subr.bf16.mxu0 0
    %192 = vmatpush1.bf16.msra.mxu0 0
    %193 = vmatprep.mubr.bf16.mxu0 0
    %194 = vmatmul.mubr.bf16.gmra.mrb[0].mxu0 %v156
    %v195 = vpop.f32.mrb[0].mxu0
    %v196 = vadd.f32 %v141, %v195
    %v197 = vpop.f32.mrb[0].mxu0
    %v198 = vpop.f32.mrb[0].mxu0
    %v199 = vadd.f32 %v141, %v198
    %v200 = vpop.f32.mrb[0].mxu0
    %201 = vmatprep.mubr.bf16.mxu0 0
    %202 = vmatmul.mubr.bf16.gmra.mrb[0].mxu0 %v159
    %v203 = vpop.f32.mrb[0].mxu0
    %v204 = vadd.f32 %v141, %v203
    %v205 = vpop.f32.mrb[0].mxu0
    %v206 = vpop.f32.mrb[0].mxu0
    %v207 = vadd.f32 %v141, %v206
    %v208 = vpop.f32.mrb[0].mxu0
    %209 = vdwg.mxu0
    %v210 = vpack.c.bf16 %v199, %v196
    %v211 = vpack.c.bf16 %v207, %v204
    %214 = vrot.lane.b32.xlu0 %v210, 120
    %v215 = vpop.permute.xlu0 %214
    %216 = vrot.lane.b32.xlu0 %v211, 120
    %v217 = vpop.permute.xlu0 %216
    %218 = vrot.lane.b32.xlu0 %v210, 112
    %v219 = vpop.permute.xlu0 %218
    %220 = vrot.lane.b32.xlu0 %v211, 112
    %v221 = vpop.permute.xlu0 %220
    %222 = vrot.lane.b32.xlu0 %v210, 104
    %v223 = vpop.permute.xlu0 %222
    %224 = vrot.lane.b32.xlu0 %v211, 104
    %v225 = vpop.permute.xlu0 %224
    %226 = vrot.lane.b32.xlu0 %v210, 96
    %v227 = vpop.permute.xlu0 %226
    %228 = vrot.lane.b32.xlu0 %v211, 96
    %v229 = vpop.permute.xlu0 %228
    %230 = vrot.lane.b32.xlu0 %v210, 88
    %v231 = vpop.permute.xlu0 %230
    %232 = vrot.lane.b32.xlu0 %v211, 88
    %v233 = vpop.permute.xlu0 %232
    %234 = vrot.lane.b32.xlu0 %v210, 80
    %v235 = vpop.permute.xlu0 %234
    %236 = vrot.lane.b32.xlu0 %v211, 80
    %v237 = vpop.permute.xlu0 %236
    %238 = vrot.lane.b32.xlu0 %v210, 72
    %v239 = vpop.permute.xlu0 %238
    %240 = vrot.lane.b32.xlu0 %v211, 72
    %v241 = vpop.permute.xlu0 %240
    %242 = vrot.lane.b32.xlu0 %v210, 64
    %v243 = vpop.permute.xlu0 %242
    %244 = vrot.lane.b32.xlu0 %v211, 64
    %v245 = vpop.permute.xlu0 %244
    %246 = vrot.lane.b32.xlu0 %v210, 56
    %v247 = vpop.permute.xlu0 %246
    %248 = vrot.lane.b32.xlu0 %v211, 56
    %v249 = vpop.permute.xlu0 %248
    %250 = vrot.lane.b32.xlu0 %v210, 48
    %v251 = vpop.permute.xlu0 %250
    %252 = vrot.lane.b32.xlu0 %v211, 48
    %v253 = vpop.permute.xlu0 %252
    %254 = vrot.lane.b32.xlu0 %v210, 40
    %v255 = vpop.permute.xlu0 %254
    %256 = vrot.lane.b32.xlu0 %v211, 40
    %v257 = vpop.permute.xlu0 %256
    %v260 = vpack.i.b16 %v215, %v210
    %v262 = vshrl.u32 %v210, 16
    %v263 = vshrl.u32 %v215, 16
    %v264 = vpack.i.b16 %v263, %v262
    %v268 = vpack.i.b16 %v223, %v219
    %v270 = vshrl.u32 %v219, 16
    %v271 = vshrl.u32 %v223, 16
    %v272 = vpack.i.b16 %v271, %v270
    %v276 = vpack.i.b16 %v231, %v227
    %v278 = vshrl.u32 %v227, 16
    %v279 = vshrl.u32 %v231, 16
    %v280 = vpack.i.b16 %v279, %v278
    %v284 = vpack.i.b16 %v239, %v235
    %v286 = vshrl.u32 %v235, 16
    %v287 = vshrl.u32 %v239, 16
    %v288 = vpack.i.b16 %v287, %v286
    %v292 = vpack.i.b16 %v247, %v243
    %v294 = vshrl.u32 %v243, 16
    %v295 = vshrl.u32 %v247, 16
    %v296 = vpack.i.b16 %v295, %v294
    %v300 = vpack.i.b16 %v255, %v251
    %v302 = vshrl.u32 %v251, 16
    %v303 = vshrl.u32 %v255, 16
    %v304 = vpack.i.b16 %v303, %v302
    %v307 = vpack.i.b16 0, 0
    %v309 = vshrl.u32 0, 16
    %v310 = vpack.i.b16 %v309, %v309
    %v314 = vpack.i.b16 %v217, %v211
    %v316 = vshrl.u32 %v211, 16
    %v317 = vshrl.u32 %v217, 16
    %v318 = vpack.i.b16 %v317, %v316
    %v322 = vpack.i.b16 %v225, %v221
    %v324 = vshrl.u32 %v221, 16
    %v325 = vshrl.u32 %v225, 16
    %v326 = vpack.i.b16 %v325, %v324
    %v330 = vpack.i.b16 %v233, %v229
    %v332 = vshrl.u32 %v229, 16
    %v333 = vshrl.u32 %v233, 16
    %v334 = vpack.i.b16 %v333, %v332
    %v338 = vpack.i.b16 %v241, %v237
    %v340 = vshrl.u32 %v237, 16
    %v341 = vshrl.u32 %v241, 16
    %v342 = vpack.i.b16 %v341, %v340
    %v346 = vpack.i.b16 %v249, %v245
    %v348 = vshrl.u32 %v245, 16
    %v349 = vshrl.u32 %v249, 16
    %v350 = vpack.i.b16 %v349, %v348
    %v354 = vpack.i.b16 %v257, %v253
    %v356 = vshrl.u32 %v253, 16
    %v357 = vshrl.u32 %v257, 16
    %v358 = vpack.i.b16 %v357, %v356
    %v360 = vcombine.low %v260, %v276
    %v361 = vcombine.high %v260, %v276
    %v363 = vunpack.c.l.s4 1983009808
    %v364 = vunpack.c.0.s8 %v363
    %v365 = vlaneseq
    %v366 = vshrl.u32 %v365, 7
    %v367 = vsub.s32 %v364, %v366
    %v368 = vrot.slane %v360, %v367
    %v370 = vunpack.c.l.s4 1983009808
    %v371 = vunpack.c.0.s8 %v370
    %v372 = vlaneseq
    %v373 = vshrl.u32 %v372, 7
    %v374 = vsub.s32 %v371, %v373
    %v375 = vrot.slane %v361, %v374
    %v376 = vcombine.low %v268, %v284
    %v377 = vcombine.high %v268, %v284
    %v379 = vunpack.c.l.s4 1983009808
    %v380 = vunpack.c.0.s8 %v379
    %v381 = vlaneseq
    %v382 = vshrl.u32 %v381, 7
    %v383 = vsub.s32 %v380, %v382
    %v384 = vrot.slane %v376, %v383
    %v386 = vunpack.c.l.s4 1983009808
    %v387 = vunpack.c.0.s8 %v386
    %v388 = vlaneseq
    %v389 = vshrl.u32 %v388, 7
    %v390 = vsub.s32 %v387, %v389
    %v391 = vrot.slane %v377, %v390
    %v392 = vcombine.high %v292, %v307
    %v394 = vunpack.c.l.s4 1983009808
    %v395 = vunpack.c.0.s8 %v394
    %v396 = vlaneseq
    %v397 = vshrl.u32 %v396, 7
    %v398 = vsub.s32 %v395, %v397
    %v399 = vrot.slane %v292, %v398
    %v401 = vunpack.c.l.s4 1983009808
    %v402 = vunpack.c.0.s8 %v401
    %v403 = vlaneseq
    %v404 = vshrl.u32 %v403, 7
    %v405 = vsub.s32 %v402, %v404
    %v406 = vrot.slane %v392, %v405
    %v407 = vcombine.high %v300, %v307
    %v409 = vunpack.c.l.s4 1983009808
    %v410 = vunpack.c.0.s8 %v409
    %v411 = vlaneseq
    %v412 = vshrl.u32 %v411, 7
    %v413 = vsub.s32 %v410, %v412
    %v414 = vrot.slane %v300, %v413
    %v416 = vunpack.c.l.s4 1983009808
    %v417 = vunpack.c.0.s8 %v416
    %v418 = vlaneseq
    %v419 = vshrl.u32 %v418, 7
    %v420 = vsub.s32 %v417, %v419
    %v421 = vrot.slane %v407, %v420
    %v422 = vcombine.low %v368, %v384
    %v423 = vcombine.high %v368, %v384
    %v425 = vunpack.c.l.s4 1934713408
    %v426 = vunpack.c.0.s8 %v425
    %v427 = vlaneseq
    %v428 = vshrl.u32 %v427, 7
    %v429 = vsub.s32 %v426, %v428
    %v430 = vrot.slane %v422, %v429
    %v432 = vunpack.c.l.s4 1934713408
    %v433 = vunpack.c.0.s8 %v432
    %v434 = vlaneseq
    %v435 = vshrl.u32 %v434, 7
    %v436 = vsub.s32 %v433, %v435
    %v437 = vrot.slane %v423, %v436
    %v438 = vcombine.low %v375, %v391
    %v439 = vcombine.high %v375, %v391
    %v441 = vunpack.c.l.s4 1934713408
    %v442 = vunpack.c.0.s8 %v441
    %v443 = vlaneseq
    %v444 = vshrl.u32 %v443, 7
    %v445 = vsub.s32 %v442, %v444
    %v446 = vrot.slane %v438, %v445
    %v448 = vunpack.c.l.s4 1934713408
    %v449 = vunpack.c.0.s8 %v448
    %v450 = vlaneseq
    %v451 = vshrl.u32 %v450, 7
    %v452 = vsub.s32 %v449, %v451
    %v453 = vrot.slane %v439, %v452
    %v454 = vcombine.low %v399, %v414
    %v455 = vcombine.high %v399, %v414
    %v457 = vunpack.c.l.s4 1934713408
    %v458 = vunpack.c.0.s8 %v457
    %v459 = vlaneseq
    %v460 = vshrl.u32 %v459, 7
    %v461 = vsub.s32 %v458, %v460
    %v462 = vrot.slane %v454, %v461
    %v464 = vunpack.c.l.s4 1934713408
    %v465 = vunpack.c.0.s8 %v464
    %v466 = vlaneseq
    %v467 = vshrl.u32 %v466, 7
    %v468 = vsub.s32 %v465, %v467
    %v469 = vrot.slane %v455, %v468
    %v470 = vcombine.low %v406, %v421
    %v471 = vcombine.high %v406, %v421
    %v473 = vunpack.c.l.s4 1934713408
    %v474 = vunpack.c.0.s8 %v473
    %v475 = vlaneseq
    %v476 = vshrl.u32 %v475, 7
    %v477 = vsub.s32 %v474, %v476
    %v478 = vrot.slane %v470, %v477
    %v480 = vunpack.c.l.s4 1934713408
    %v481 = vunpack.c.0.s8 %v480
    %v482 = vlaneseq
    %v483 = vshrl.u32 %v482, 7
    %v484 = vsub.s32 %v481, %v483
    %v485 = vrot.slane %v471, %v484
    %v486 = vcombine.low %v430, %v462
    %v487 = vcombine.high %v430, %v462
    %v488 = vcombine.low %v437, %v469
    %v489 = vcombine.high %v437, %v469
    %v490 = vcombine.low %v446, %v478
    %v491 = vcombine.high %v446, %v478
    %v492 = vcombine.low %v453, %v485
    %v493 = vcombine.high %v453, %v485
    %v494 = vcombine.low %v264, %v280
    %v495 = vcombine.high %v264, %v280
    %v497 = vunpack.c.l.s4 1983009808
    %v498 = vunpack.c.0.s8 %v497
    %v499 = vlaneseq
    %v500 = vshrl.u32 %v499, 7
    %v501 = vsub.s32 %v498, %v500
    %v502 = vrot.slane %v494, %v501
    %v504 = vunpack.c.l.s4 1983009808
    %v505 = vunpack.c.0.s8 %v504
    %v506 = vlaneseq
    %v507 = vshrl.u32 %v506, 7
    %v508 = vsub.s32 %v505, %v507
    %v509 = vrot.slane %v495, %v508
    %v510 = vcombine.low %v272, %v288
    %v511 = vcombine.high %v272, %v288
    %v513 = vunpack.c.l.s4 1983009808
    %v514 = vunpack.c.0.s8 %v513
    %v515 = vlaneseq
    %v516 = vshrl.u32 %v515, 7
    %v517 = vsub.s32 %v514, %v516
    %v518 = vrot.slane %v510, %v517
    %v520 = vunpack.c.l.s4 1983009808
    %v521 = vunpack.c.0.s8 %v520
    %v522 = vlaneseq
    %v523 = vshrl.u32 %v522, 7
    %v524 = vsub.s32 %v521, %v523
    %v525 = vrot.slane %v511, %v524
    %v526 = vcombine.high %v296, %v310
    %v528 = vunpack.c.l.s4 1983009808
    %v529 = vunpack.c.0.s8 %v528
    %v530 = vlaneseq
    %v531 = vshrl.u32 %v530, 7
    %v532 = vsub.s32 %v529, %v531
    %v533 = vrot.slane %v296, %v532
    %v535 = vunpack.c.l.s4 1983009808
    %v536 = vunpack.c.0.s8 %v535
    %v537 = vlaneseq
    %v538 = vshrl.u32 %v537, 7
    %v539 = vsub.s32 %v536, %v538
    %v540 = vrot.slane %v526, %v539
    %v541 = vcombine.high %v304, %v310
    %v543 = vunpack.c.l.s4 1983009808
    %v544 = vunpack.c.0.s8 %v543
    %v545 = vlaneseq
    %v546 = vshrl.u32 %v545, 7
    %v547 = vsub.s32 %v544, %v546
    %v548 = vrot.slane %v304, %v547
    %v550 = vunpack.c.l.s4 1983009808
    %v551 = vunpack.c.0.s8 %v550
    %v552 = vlaneseq
    %v553 = vshrl.u32 %v552, 7
    %v554 = vsub.s32 %v551, %v553
    %v555 = vrot.slane %v541, %v554
    %v556 = vcombine.low %v502, %v518
    %v557 = vcombine.high %v502, %v518
    %v559 = vunpack.c.l.s4 1934713408
    %v560 = vunpack.c.0.s8 %v559
    %v561 = vlaneseq
    %v562 = vshrl.u32 %v561, 7
    %v563 = vsub.s32 %v560, %v562
    %v564 = vrot.slane %v556, %v563
    %v566 = vunpack.c.l.s4 1934713408
    %v567 = vunpack.c.0.s8 %v566
    %v568 = vlaneseq
    %v569 = vshrl.u32 %v568, 7
    %v570 = vsub.s32 %v567, %v569
    %v571 = vrot.slane %v557, %v570
    %v572 = vcombine.low %v509, %v525
    %v573 = vcombine.high %v509, %v525
    %v575 = vunpack.c.l.s4 1934713408
    %v576 = vunpack.c.0.s8 %v575
    %v577 = vlaneseq
    %v578 = vshrl.u32 %v577, 7
    %v579 = vsub.s32 %v576, %v578
    %v580 = vrot.slane %v572, %v579
    %v582 = vunpack.c.l.s4 1934713408
    %v583 = vunpack.c.0.s8 %v582
    %v584 = vlaneseq
    %v585 = vshrl.u32 %v584, 7
    %v586 = vsub.s32 %v583, %v585
    %v587 = vrot.slane %v573, %v586
    %v588 = vcombine.low %v533, %v548
    %v589 = vcombine.high %v533, %v548
    %v591 = vunpack.c.l.s4 1934713408
    %v592 = vunpack.c.0.s8 %v591
    %v593 = vlaneseq
    %v594 = vshrl.u32 %v593, 7
    %v595 = vsub.s32 %v592, %v594
    %v596 = vrot.slane %v588, %v595
    %v598 = vunpack.c.l.s4 1934713408
    %v599 = vunpack.c.0.s8 %v598
    %v600 = vlaneseq
    %v601 = vshrl.u32 %v600, 7
    %v602 = vsub.s32 %v599, %v601
    %v603 = vrot.slane %v589, %v602
    %v604 = vcombine.low %v540, %v555
    %v605 = vcombine.high %v540, %v555
    %v607 = vunpack.c.l.s4 1934713408
    %v608 = vunpack.c.0.s8 %v607
    %v609 = vlaneseq
    %v610 = vshrl.u32 %v609, 7
    %v611 = vsub.s32 %v608, %v610
    %v612 = vrot.slane %v604, %v611
    %v614 = vunpack.c.l.s4 1934713408
    %v615 = vunpack.c.0.s8 %v614
    %v616 = vlaneseq
    %v617 = vshrl.u32 %v616, 7
    %v618 = vsub.s32 %v615, %v617
    %v619 = vrot.slane %v605, %v618
    %v620 = vcombine.low %v564, %v596
    %v621 = vcombine.high %v564, %v596
    %v622 = vcombine.low %v571, %v603
    %v623 = vcombine.high %v571, %v603
    %v624 = vcombine.low %v580, %v612
    %v625 = vcombine.high %v580, %v612
    %v626 = vcombine.low %v587, %v619
    %v627 = vcombine.high %v587, %v619
    %v628 = vcombine.low %v314, %v330
    %v629 = vcombine.high %v314, %v330
    %v631 = vunpack.c.l.s4 1983009808
    %v632 = vunpack.c.0.s8 %v631
    %v633 = vlaneseq
    %v634 = vshrl.u32 %v633, 7
    %v635 = vsub.s32 %v632, %v634
    %v636 = vrot.slane %v628, %v635
    %v638 = vunpack.c.l.s4 1983009808
    %v639 = vunpack.c.0.s8 %v638
    %v640 = vlaneseq
    %v641 = vshrl.u32 %v640, 7
    %v642 = vsub.s32 %v639, %v641
    %v643 = vrot.slane %v629, %v642
    %v644 = vcombine.low %v322, %v338
    %v645 = vcombine.high %v322, %v338
    %v647 = vunpack.c.l.s4 1983009808
    %v648 = vunpack.c.0.s8 %v647
    %v649 = vlaneseq
    %v650 = vshrl.u32 %v649, 7
    %v651 = vsub.s32 %v648, %v650
    %v652 = vrot.slane %v644, %v651
    %v654 = vunpack.c.l.s4 1983009808
    %v655 = vunpack.c.0.s8 %v654
    %v656 = vlaneseq
    %v657 = vshrl.u32 %v656, 7
    %v658 = vsub.s32 %v655, %v657
    %v659 = vrot.slane %v645, %v658
    %v660 = vcombine.high %v346, %v307
    %v662 = vunpack.c.l.s4 1983009808
    %v663 = vunpack.c.0.s8 %v662
    %v664 = vlaneseq
    %v665 = vshrl.u32 %v664, 7
    %v666 = vsub.s32 %v663, %v665
    %v667 = vrot.slane %v346, %v666
    %v669 = vunpack.c.l.s4 1983009808
    %v670 = vunpack.c.0.s8 %v669
    %v671 = vlaneseq
    %v672 = vshrl.u32 %v671, 7
    %v673 = vsub.s32 %v670, %v672
    %v674 = vrot.slane %v660, %v673
    %v675 = vcombine.high %v354, %v307
    %v677 = vunpack.c.l.s4 1983009808
    %v678 = vunpack.c.0.s8 %v677
    %v679 = vlaneseq
    %v680 = vshrl.u32 %v679, 7
    %v681 = vsub.s32 %v678, %v680
    %v682 = vrot.slane %v354, %v681
    %v684 = vunpack.c.l.s4 1983009808
    %v685 = vunpack.c.0.s8 %v684
    %v686 = vlaneseq
    %v687 = vshrl.u32 %v686, 7
    %v688 = vsub.s32 %v685, %v687
    %v689 = vrot.slane %v675, %v688
    %v690 = vcombine.low %v636, %v652
    %v691 = vcombine.high %v636, %v652
    %v693 = vunpack.c.l.s4 1934713408
    %v694 = vunpack.c.0.s8 %v693
    %v695 = vlaneseq
    %v696 = vshrl.u32 %v695, 7
    %v697 = vsub.s32 %v694, %v696
    %v698 = vrot.slane %v690, %v697
    %v700 = vunpack.c.l.s4 1934713408
    %v701 = vunpack.c.0.s8 %v700
    %v702 = vlaneseq
    %v703 = vshrl.u32 %v702, 7
    %v704 = vsub.s32 %v701, %v703
    %v705 = vrot.slane %v691, %v704
    %v706 = vcombine.low %v643, %v659
    %v707 = vcombine.high %v643, %v659
    %v709 = vunpack.c.l.s4 1934713408
    %v710 = vunpack.c.0.s8 %v709
    %v711 = vlaneseq
    %v712 = vshrl.u32 %v711, 7
    %v713 = vsub.s32 %v710, %v712
    %v714 = vrot.slane %v706, %v713
    %v716 = vunpack.c.l.s4 1934713408
    %v717 = vunpack.c.0.s8 %v716
    %v718 = vlaneseq
    %v719 = vshrl.u32 %v718, 7
    %v720 = vsub.s32 %v717, %v719
    %v721 = vrot.slane %v707, %v720
    %v722 = vcombine.low %v667, %v682
    %v723 = vcombine.high %v667, %v682
    %v725 = vunpack.c.l.s4 1934713408
    %v726 = vunpack.c.0.s8 %v725
    %v727 = vlaneseq
    %v728 = vshrl.u32 %v727, 7
    %v729 = vsub.s32 %v726, %v728
    %v730 = vrot.slane %v722, %v729
    %v732 = vunpack.c.l.s4 1934713408
    %v733 = vunpack.c.0.s8 %v732
    %v734 = vlaneseq
    %v735 = vshrl.u32 %v734, 7
    %v736 = vsub.s32 %v733, %v735
    %v737 = vrot.slane %v723, %v736
    %v738 = vcombine.low %v674, %v689
    %v739 = vcombine.high %v674, %v689
    %v741 = vunpack.c.l.s4 1934713408
    %v742 = vunpack.c.0.s8 %v741
    %v743 = vlaneseq
    %v744 = vshrl.u32 %v743, 7
    %v745 = vsub.s32 %v742, %v744
    %v746 = vrot.slane %v738, %v745
    %v748 = vunpack.c.l.s4 1934713408
    %v749 = vunpack.c.0.s8 %v748
    %v750 = vlaneseq
    %v751 = vshrl.u32 %v750, 7
    %v752 = vsub.s32 %v749, %v751
    %v753 = vrot.slane %v739, %v752
    %v754 = vcombine.low %v698, %v730
    %v755 = vcombine.high %v698, %v730
    %v756 = vcombine.low %v705, %v737
    %v757 = vcombine.high %v705, %v737
    %v758 = vcombine.low %v714, %v746
    %v759 = vcombine.high %v714, %v746
    %v760 = vcombine.low %v721, %v753
    %v761 = vcombine.high %v721, %v753
    %v762 = vcombine.low %v318, %v334
    %v763 = vcombine.high %v318, %v334
    %v765 = vunpack.c.l.s4 1983009808
    %v766 = vunpack.c.0.s8 %v765
    %v767 = vlaneseq
    %v768 = vshrl.u32 %v767, 7
    %v769 = vsub.s32 %v766, %v768
    %v770 = vrot.slane %v762, %v769
    %v772 = vunpack.c.l.s4 1983009808
    %v773 = vunpack.c.0.s8 %v772
    %v774 = vlaneseq
    %v775 = vshrl.u32 %v774, 7
    %v776 = vsub.s32 %v773, %v775
    %v777 = vrot.slane %v763, %v776
    %v778 = vcombine.low %v326, %v342
    %v779 = vcombine.high %v326, %v342
    %v781 = vunpack.c.l.s4 1983009808
    %v782 = vunpack.c.0.s8 %v781
    %v783 = vlaneseq
    %v784 = vshrl.u32 %v783, 7
    %v785 = vsub.s32 %v782, %v784
    %v786 = vrot.slane %v778, %v785
    %v788 = vunpack.c.l.s4 1983009808
    %v789 = vunpack.c.0.s8 %v788
    %v790 = vlaneseq
    %v791 = vshrl.u32 %v790, 7
    %v792 = vsub.s32 %v789, %v791
    %v793 = vrot.slane %v779, %v792
    %v794 = vcombine.high %v350, %v310
    %v796 = vunpack.c.l.s4 1983009808
    %v797 = vunpack.c.0.s8 %v796
    %v798 = vlaneseq
    %v799 = vshrl.u32 %v798, 7
    %v800 = vsub.s32 %v797, %v799
    %v801 = vrot.slane %v350, %v800
    %v803 = vunpack.c.l.s4 1983009808
    %v804 = vunpack.c.0.s8 %v803
    %v805 = vlaneseq
    %v806 = vshrl.u32 %v805, 7
    %v807 = vsub.s32 %v804, %v806
    %v808 = vrot.slane %v794, %v807
    %v809 = vcombine.high %v358, %v310
    %v811 = vunpack.c.l.s4 1983009808
    %v812 = vunpack.c.0.s8 %v811
    %v813 = vlaneseq
    %v814 = vshrl.u32 %v813, 7
    %v815 = vsub.s32 %v812, %v814
    %v816 = vrot.slane %v358, %v815
    %v818 = vunpack.c.l.s4 1983009808
    %v819 = vunpack.c.0.s8 %v818
    %v820 = vlaneseq
    %v821 = vshrl.u32 %v820, 7
    %v822 = vsub.s32 %v819, %v821
    %v823 = vrot.slane %v809, %v822
    %v824 = vcombine.low %v770, %v786
    %v825 = vcombine.high %v770, %v786
    %v827 = vunpack.c.l.s4 1934713408
    %v828 = vunpack.c.0.s8 %v827
    %v829 = vlaneseq
    %v830 = vshrl.u32 %v829, 7
    %v831 = vsub.s32 %v828, %v830
    %v832 = vrot.slane %v824, %v831
    %v834 = vunpack.c.l.s4 1934713408
    %v835 = vunpack.c.0.s8 %v834
    %v836 = vlaneseq
    %v837 = vshrl.u32 %v836, 7
    %v838 = vsub.s32 %v835, %v837
    %v839 = vrot.slane %v825, %v838
    %v840 = vcombine.low %v777, %v793
    %v841 = vcombine.high %v777, %v793
    %v843 = vunpack.c.l.s4 1934713408
    %v844 = vunpack.c.0.s8 %v843
    %v845 = vlaneseq
    %v846 = vshrl.u32 %v845, 7
    %v847 = vsub.s32 %v844, %v846
    %v848 = vrot.slane %v840, %v847
    %v850 = vunpack.c.l.s4 1934713408
    %v851 = vunpack.c.0.s8 %v850
    %v852 = vlaneseq
    %v853 = vshrl.u32 %v852, 7
    %v854 = vsub.s32 %v851, %v853
    %v855 = vrot.slane %v841, %v854
    %v856 = vcombine.low %v801, %v816
    %v857 = vcombine.high %v801, %v816
    %v859 = vunpack.c.l.s4 1934713408
    %v860 = vunpack.c.0.s8 %v859
    %v861 = vlaneseq
    %v862 = vshrl.u32 %v861, 7
    %v863 = vsub.s32 %v860, %v862
    %v864 = vrot.slane %v856, %v863
    %v866 = vunpack.c.l.s4 1934713408
    %v867 = vunpack.c.0.s8 %v866
    %v868 = vlaneseq
    %v869 = vshrl.u32 %v868, 7
    %v870 = vsub.s32 %v867, %v869
    %v871 = vrot.slane %v857, %v870
    %v872 = vcombine.low %v808, %v823
    %v873 = vcombine.high %v808, %v823
    %v875 = vunpack.c.l.s4 1934713408
    %v876 = vunpack.c.0.s8 %v875
    %v877 = vlaneseq
    %v878 = vshrl.u32 %v877, 7
    %v879 = vsub.s32 %v876, %v878
    %v880 = vrot.slane %v872, %v879
    %v882 = vunpack.c.l.s4 1934713408
    %v883 = vunpack.c.0.s8 %v882
    %v884 = vlaneseq
    %v885 = vshrl.u32 %v884, 7
    %v886 = vsub.s32 %v883, %v885
    %v887 = vrot.slane %v873, %v886
    %v888 = vcombine.low %v832, %v864
    %v889 = vcombine.high %v832, %v864
    %v890 = vcombine.low %v839, %v871
    %v891 = vcombine.high %v839, %v871
    %v892 = vcombine.low %v848, %v880
    %v893 = vcombine.high %v848, %v880
    %v894 = vcombine.low %v855, %v887
    %v895 = vcombine.high %v855, %v887
    %v896 = vcombine.low %v486, %v488
    %v897 = vcombine.high %v486, %v488
    %v899 = vunpack.c.l.s4 1983009808
    %v900 = vunpack.c.0.s8 %v899
    %v901 = vlaneseq
    %v902 = vshrl.u32 %v901, 7
    %v903 = vsub.s32 %v900, %v902
    %v904 = vrot.slane %v896, %v903
    %v906 = vunpack.c.l.s4 1983009808
    %v907 = vunpack.c.0.s8 %v906
    %v908 = vlaneseq
    %v909 = vshrl.u32 %v908, 7
    %v910 = vsub.s32 %v907, %v909
    %v911 = vrot.slane %v897, %v910
    %v912 = vcombine.low %v487, %v489
    %v913 = vcombine.high %v487, %v489
    %v915 = vunpack.c.l.s4 1983009808
    %v916 = vunpack.c.0.s8 %v915
    %v917 = vlaneseq
    %v918 = vshrl.u32 %v917, 7
    %v919 = vsub.s32 %v916, %v918
    %v920 = vrot.slane %v912, %v919
    %v922 = vunpack.c.l.s4 1983009808
    %v923 = vunpack.c.0.s8 %v922
    %v924 = vlaneseq
    %v925 = vshrl.u32 %v924, 7
    %v926 = vsub.s32 %v923, %v925
    %v927 = vrot.slane %v913, %v926
    %v928 = vcombine.low %v490, %v492
    %v929 = vcombine.high %v490, %v492
    %v931 = vunpack.c.l.s4 1983009808
    %v932 = vunpack.c.0.s8 %v931
    %v933 = vlaneseq
    %v934 = vshrl.u32 %v933, 7
    %v935 = vsub.s32 %v932, %v934
    %v936 = vrot.slane %v928, %v935
    %v938 = vunpack.c.l.s4 1983009808
    %v939 = vunpack.c.0.s8 %v938
    %v940 = vlaneseq
    %v941 = vshrl.u32 %v940, 7
    %v942 = vsub.s32 %v939, %v941
    %v943 = vrot.slane %v929, %v942
    %v944 = vcombine.low %v491, %v493
    %v945 = vcombine.high %v491, %v493
    %v947 = vunpack.c.l.s4 1983009808
    %v948 = vunpack.c.0.s8 %v947
    %v949 = vlaneseq
    %v950 = vshrl.u32 %v949, 7
    %v951 = vsub.s32 %v948, %v950
    %v952 = vrot.slane %v944, %v951
    %v954 = vunpack.c.l.s4 1983009808
    %v955 = vunpack.c.0.s8 %v954
    %v956 = vlaneseq
    %v957 = vshrl.u32 %v956, 7
    %v958 = vsub.s32 %v955, %v957
    %v959 = vrot.slane %v945, %v958
    %v960 = vcombine.low %v904, %v920
    %v961 = vcombine.high %v904, %v920
    %v963 = vunpack.c.l.s4 1934713408
    %v964 = vunpack.c.0.s8 %v963
    %v965 = vlaneseq
    %v966 = vshrl.u32 %v965, 7
    %v967 = vsub.s32 %v964, %v966
    %v968 = vrot.slane %v960, %v967
    %v970 = vunpack.c.l.s4 1934713408
    %v971 = vunpack.c.0.s8 %v970
    %v972 = vlaneseq
    %v973 = vshrl.u32 %v972, 7
    %v974 = vsub.s32 %v971, %v973
    %v975 = vrot.slane %v961, %v974
    %v976 = vcombine.low %v911, %v927
    %v978 = vunpack.c.l.s4 1934713408
    %v979 = vunpack.c.0.s8 %v978
    %v980 = vlaneseq
    %v981 = vshrl.u32 %v980, 7
    %v982 = vsub.s32 %v979, %v981
    %v983 = vrot.slane %v976, %v982
    %v984 = vcombine.low %v936, %v952
    %v985 = vcombine.high %v936, %v952
    %v987 = vunpack.c.l.s4 1934713408
    %v988 = vunpack.c.0.s8 %v987
    %v989 = vlaneseq
    %v990 = vshrl.u32 %v989, 7
    %v991 = vsub.s32 %v988, %v990
    %v992 = vrot.slane %v984, %v991
    %v994 = vunpack.c.l.s4 1934713408
    %v995 = vunpack.c.0.s8 %v994
    %v996 = vlaneseq
    %v997 = vshrl.u32 %v996, 7
    %v998 = vsub.s32 %v995, %v997
    %v999 = vrot.slane %v985, %v998
    %v1000 = vcombine.low %v943, %v959
    %v1002 = vunpack.c.l.s4 1934713408
    %v1003 = vunpack.c.0.s8 %v1002
    %v1004 = vlaneseq
    %v1005 = vshrl.u32 %v1004, 7
    %v1006 = vsub.s32 %v1003, %v1005
    %v1007 = vrot.slane %v1000, %v1006
    %v1008 = vcombine.low %v968, %v992
    %v1009 = vcombine.high %v968, %v992
    %v1010 = vcombine.low %v975, %v999
    %v1011 = vcombine.high %v975, %v999
    %v1012 = vcombine.low %v983, %v1007
    %v1013 = vcombine.high %v983, %v1007
    %v1014 = vcombine.low %v620, %v622
    %v1015 = vcombine.high %v620, %v622
    %v1017 = vunpack.c.l.s4 1983009808
    %v1018 = vunpack.c.0.s8 %v1017
    %v1019 = vlaneseq
    %v1020 = vshrl.u32 %v1019, 7
    %v1021 = vsub.s32 %v1018, %v1020
    %v1022 = vrot.slane %v1014, %v1021
    %v1024 = vunpack.c.l.s4 1983009808
    %v1025 = vunpack.c.0.s8 %v1024
    %v1026 = vlaneseq
    %v1027 = vshrl.u32 %v1026, 7
    %v1028 = vsub.s32 %v1025, %v1027
    %v1029 = vrot.slane %v1015, %v1028
    %v1030 = vcombine.low %v621, %v623
    %v1031 = vcombine.high %v621, %v623
    %v1033 = vunpack.c.l.s4 1983009808
    %v1034 = vunpack.c.0.s8 %v1033
    %v1035 = vlaneseq
    %v1036 = vshrl.u32 %v1035, 7
    %v1037 = vsub.s32 %v1034, %v1036
    %v1038 = vrot.slane %v1030, %v1037
    %v1040 = vunpack.c.l.s4 1983009808
    %v1041 = vunpack.c.0.s8 %v1040
    %v1042 = vlaneseq
    %v1043 = vshrl.u32 %v1042, 7
    %v1044 = vsub.s32 %v1041, %v1043
    %v1045 = vrot.slane %v1031, %v1044
    %v1046 = vcombine.low %v624, %v626
    %v1047 = vcombine.high %v624, %v626
    %v1049 = vunpack.c.l.s4 1983009808
    %v1050 = vunpack.c.0.s8 %v1049
    %v1051 = vlaneseq
    %v1052 = vshrl.u32 %v1051, 7
    %v1053 = vsub.s32 %v1050, %v1052
    %v1054 = vrot.slane %v1046, %v1053
    %v1056 = vunpack.c.l.s4 1983009808
    %v1057 = vunpack.c.0.s8 %v1056
    %v1058 = vlaneseq
    %v1059 = vshrl.u32 %v1058, 7
    %v1060 = vsub.s32 %v1057, %v1059
    %v1061 = vrot.slane %v1047, %v1060
    %v1062 = vcombine.low %v625, %v627
    %v1063 = vcombine.high %v625, %v627
    %v1065 = vunpack.c.l.s4 1983009808
    %v1066 = vunpack.c.0.s8 %v1065
    %v1067 = vlaneseq
    %v1068 = vshrl.u32 %v1067, 7
    %v1069 = vsub.s32 %v1066, %v1068
    %v1070 = vrot.slane %v1062, %v1069
    %v1072 = vunpack.c.l.s4 1983009808
    %v1073 = vunpack.c.0.s8 %v1072
    %v1074 = vlaneseq
    %v1075 = vshrl.u32 %v1074, 7
    %v1076 = vsub.s32 %v1073, %v1075
    %v1077 = vrot.slane %v1063, %v1076
    %v1078 = vcombine.low %v1022, %v1038
    %v1079 = vcombine.high %v1022, %v1038
    %v1081 = vunpack.c.l.s4 1934713408
    %v1082 = vunpack.c.0.s8 %v1081
    %v1083 = vlaneseq
    %v1084 = vshrl.u32 %v1083, 7
    %v1085 = vsub.s32 %v1082, %v1084
    %v1086 = vrot.slane %v1078, %v1085
    %v1088 = vunpack.c.l.s4 1934713408
    %v1089 = vunpack.c.0.s8 %v1088
    %v1090 = vlaneseq
    %v1091 = vshrl.u32 %v1090, 7
    %v1092 = vsub.s32 %v1089, %v1091
    %v1093 = vrot.slane %v1079, %v1092
    %v1094 = vcombine.low %v1029, %v1045
    %v1096 = vunpack.c.l.s4 1934713408
    %v1097 = vunpack.c.0.s8 %v1096
    %v1098 = vlaneseq
    %v1099 = vshrl.u32 %v1098, 7
    %v1100 = vsub.s32 %v1097, %v1099
    %v1101 = vrot.slane %v1094, %v1100
    %v1102 = vcombine.low %v1054, %v1070
    %v1103 = vcombine.high %v1054, %v1070
    %v1105 = vunpack.c.l.s4 1934713408
    %v1106 = vunpack.c.0.s8 %v1105
    %v1107 = vlaneseq
    %v1108 = vshrl.u32 %v1107, 7
    %v1109 = vsub.s32 %v1106, %v1108
    %v1110 = vrot.slane %v1102, %v1109
    %v1112 = vunpack.c.l.s4 1934713408
    %v1113 = vunpack.c.0.s8 %v1112
    %v1114 = vlaneseq
    %v1115 = vshrl.u32 %v1114, 7
    %v1116 = vsub.s32 %v1113, %v1115
    %v1117 = vrot.slane %v1103, %v1116
    %v1118 = vcombine.low %v1061, %v1077
    %v1120 = vunpack.c.l.s4 1934713408
    %v1121 = vunpack.c.0.s8 %v1120
    %v1122 = vlaneseq
    %v1123 = vshrl.u32 %v1122, 7
    %v1124 = vsub.s32 %v1121, %v1123
    %v1125 = vrot.slane %v1118, %v1124
    %v1126 = vcombine.low %v1086, %v1110
    %v1127 = vcombine.high %v1086, %v1110
    %v1128 = vcombine.low %v1093, %v1117
    %v1129 = vcombine.high %v1093, %v1117
    %v1130 = vcombine.low %v1101, %v1125
    %v1131 = vcombine.high %v1101, %v1125
    %v1132 = vcombine.low %v754, %v756
    %v1133 = vcombine.high %v754, %v756
    %v1135 = vunpack.c.l.s4 1983009808
    %v1136 = vunpack.c.0.s8 %v1135
    %v1137 = vlaneseq
    %v1138 = vshrl.u32 %v1137, 7
    %v1139 = vsub.s32 %v1136, %v1138
    %v1140 = vrot.slane %v1132, %v1139
    %v1142 = vunpack.c.l.s4 1983009808
    %v1143 = vunpack.c.0.s8 %v1142
    %v1144 = vlaneseq
    %v1145 = vshrl.u32 %v1144, 7
    %v1146 = vsub.s32 %v1143, %v1145
    %v1147 = vrot.slane %v1133, %v1146
    %v1148 = vcombine.low %v755, %v757
    %v1149 = vcombine.high %v755, %v757
    %v1151 = vunpack.c.l.s4 1983009808
    %v1152 = vunpack.c.0.s8 %v1151
    %v1153 = vlaneseq
    %v1154 = vshrl.u32 %v1153, 7
    %v1155 = vsub.s32 %v1152, %v1154
    %v1156 = vrot.slane %v1148, %v1155
    %v1158 = vunpack.c.l.s4 1983009808
    %v1159 = vunpack.c.0.s8 %v1158
    %v1160 = vlaneseq
    %v1161 = vshrl.u32 %v1160, 7
    %v1162 = vsub.s32 %v1159, %v1161
    %v1163 = vrot.slane %v1149, %v1162
    %v1164 = vcombine.low %v758, %v760
    %v1165 = vcombine.high %v758, %v760
    %v1167 = vunpack.c.l.s4 1983009808
    %v1168 = vunpack.c.0.s8 %v1167
    %v1169 = vlaneseq
    %v1170 = vshrl.u32 %v1169, 7
    %v1171 = vsub.s32 %v1168, %v1170
    %v1172 = vrot.slane %v1164, %v1171
    %v1174 = vunpack.c.l.s4 1983009808
    %v1175 = vunpack.c.0.s8 %v1174
    %v1176 = vlaneseq
    %v1177 = vshrl.u32 %v1176, 7
    %v1178 = vsub.s32 %v1175, %v1177
    %v1179 = vrot.slane %v1165, %v1178
    %v1180 = vcombine.low %v759, %v761
    %v1181 = vcombine.high %v759, %v761
    %v1183 = vunpack.c.l.s4 1983009808
    %v1184 = vunpack.c.0.s8 %v1183
    %v1185 = vlaneseq
    %v1186 = vshrl.u32 %v1185, 7
    %v1187 = vsub.s32 %v1184, %v1186
    %v1188 = vrot.slane %v1180, %v1187
    %v1190 = vunpack.c.l.s4 1983009808
    %v1191 = vunpack.c.0.s8 %v1190
    %v1192 = vlaneseq
    %v1193 = vshrl.u32 %v1192, 7
    %v1194 = vsub.s32 %v1191, %v1193
    %v1195 = vrot.slane %v1181, %v1194
    %v1196 = vcombine.low %v1140, %v1156
    %v1197 = vcombine.high %v1140, %v1156
    %v1199 = vunpack.c.l.s4 1934713408
    %v1200 = vunpack.c.0.s8 %v1199
    %v1201 = vlaneseq
    %v1202 = vshrl.u32 %v1201, 7
    %v1203 = vsub.s32 %v1200, %v1202
    %v1204 = vrot.slane %v1196, %v1203
    %v1206 = vunpack.c.l.s4 1934713408
    %v1207 = vunpack.c.0.s8 %v1206
    %v1208 = vlaneseq
    %v1209 = vshrl.u32 %v1208, 7
    %v1210 = vsub.s32 %v1207, %v1209
    %v1211 = vrot.slane %v1197, %v1210
    %v1212 = vcombine.low %v1147, %v1163
    %v1214 = vunpack.c.l.s4 1934713408
    %v1215 = vunpack.c.0.s8 %v1214
    %v1216 = vlaneseq
    %v1217 = vshrl.u32 %v1216, 7
    %v1218 = vsub.s32 %v1215, %v1217
    %v1219 = vrot.slane %v1212, %v1218
    %v1220 = vcombine.low %v1172, %v1188
    %v1221 = vcombine.high %v1172, %v1188
    %v1223 = vunpack.c.l.s4 1934713408
    %v1224 = vunpack.c.0.s8 %v1223
    %v1225 = vlaneseq
    %v1226 = vshrl.u32 %v1225, 7
    %v1227 = vsub.s32 %v1224, %v1226
    %v1228 = vrot.slane %v1220, %v1227
    %v1230 = vunpack.c.l.s4 1934713408
    %v1231 = vunpack.c.0.s8 %v1230
    %v1232 = vlaneseq
    %v1233 = vshrl.u32 %v1232, 7
    %v1234 = vsub.s32 %v1231, %v1233
    %v1235 = vrot.slane %v1221, %v1234
    %v1236 = vcombine.low %v1179, %v1195
    %v1238 = vunpack.c.l.s4 1934713408
    %v1239 = vunpack.c.0.s8 %v1238
    %v1240 = vlaneseq
    %v1241 = vshrl.u32 %v1240, 7
    %v1242 = vsub.s32 %v1239, %v1241
    %v1243 = vrot.slane %v1236, %v1242
    %v1244 = vcombine.low %v1204, %v1228
    %v1245 = vcombine.high %v1204, %v1228
    %v1246 = vcombine.low %v1211, %v1235
    %v1247 = vcombine.high %v1211, %v1235
    %v1248 = vcombine.low %v1219, %v1243
    %v1249 = vcombine.high %v1219, %v1243
    %v1250 = vcombine.low %v888, %v890
    %v1251 = vcombine.high %v888, %v890
    %v1253 = vunpack.c.l.s4 1983009808
    %v1254 = vunpack.c.0.s8 %v1253
    %v1255 = vlaneseq
    %v1256 = vshrl.u32 %v1255, 7
    %v1257 = vsub.s32 %v1254, %v1256
    %v1258 = vrot.slane %v1250, %v1257
    %v1260 = vunpack.c.l.s4 1983009808
    %v1261 = vunpack.c.0.s8 %v1260
    %v1262 = vlaneseq
    %v1263 = vshrl.u32 %v1262, 7
    %v1264 = vsub.s32 %v1261, %v1263
    %v1265 = vrot.slane %v1251, %v1264
    %v1266 = vcombine.low %v889, %v891
    %v1267 = vcombine.high %v889, %v891
    %v1269 = vunpack.c.l.s4 1983009808
    %v1270 = vunpack.c.0.s8 %v1269
    %v1271 = vlaneseq
    %v1272 = vshrl.u32 %v1271, 7
    %v1273 = vsub.s32 %v1270, %v1272
    %v1274 = vrot.slane %v1266, %v1273
    %v1276 = vunpack.c.l.s4 1983009808
    %v1277 = vunpack.c.0.s8 %v1276
    %v1278 = vlaneseq
    %v1279 = vshrl.u32 %v1278, 7
    %v1280 = vsub.s32 %v1277, %v1279
    %v1281 = vrot.slane %v1267, %v1280
    %v1282 = vcombine.low %v892, %v894
    %v1283 = vcombine.high %v892, %v894
    %v1285 = vunpack.c.l.s4 1983009808
    %v1286 = vunpack.c.0.s8 %v1285
    %v1287 = vlaneseq
    %v1288 = vshrl.u32 %v1287, 7
    %v1289 = vsub.s32 %v1286, %v1288
    %v1290 = vrot.slane %v1282, %v1289
    %v1292 = vunpack.c.l.s4 1983009808
    %v1293 = vunpack.c.0.s8 %v1292
    %v1294 = vlaneseq
    %v1295 = vshrl.u32 %v1294, 7
    %v1296 = vsub.s32 %v1293, %v1295
    %v1297 = vrot.slane %v1283, %v1296
    %v1298 = vcombine.low %v893, %v895
    %v1299 = vcombine.high %v893, %v895
    %v1301 = vunpack.c.l.s4 1983009808
    %v1302 = vunpack.c.0.s8 %v1301
    %v1303 = vlaneseq
    %v1304 = vshrl.u32 %v1303, 7
    %v1305 = vsub.s32 %v1302, %v1304
    %v1306 = vrot.slane %v1298, %v1305
    %v1308 = vunpack.c.l.s4 1983009808
    %v1309 = vunpack.c.0.s8 %v1308
    %v1310 = vlaneseq
    %v1311 = vshrl.u32 %v1310, 7
    %v1312 = vsub.s32 %v1309, %v1311
    %v1313 = vrot.slane %v1299, %v1312
    %v1314 = vcombine.low %v1258, %v1274
    %v1315 = vcombine.high %v1258, %v1274
    %v1317 = vunpack.c.l.s4 1934713408
    %v1318 = vunpack.c.0.s8 %v1317
    %v1319 = vlaneseq
    %v1320 = vshrl.u32 %v1319, 7
    %v1321 = vsub.s32 %v1318, %v1320
    %v1322 = vrot.slane %v1314, %v1321
    %v1324 = vunpack.c.l.s4 1934713408
    %v1325 = vunpack.c.0.s8 %v1324
    %v1326 = vlaneseq
    %v1327 = vshrl.u32 %v1326, 7
    %v1328 = vsub.s32 %v1325, %v1327
    %v1329 = vrot.slane %v1315, %v1328
    %v1330 = vcombine.low %v1265, %v1281
    %v1332 = vunpack.c.l.s4 1934713408
    %v1333 = vunpack.c.0.s8 %v1332
    %v1334 = vlaneseq
    %v1335 = vshrl.u32 %v1334, 7
    %v1336 = vsub.s32 %v1333, %v1335
    %v1337 = vrot.slane %v1330, %v1336
    %v1338 = vcombine.low %v1290, %v1306
    %v1339 = vcombine.high %v1290, %v1306
    %v1341 = vunpack.c.l.s4 1934713408
    %v1342 = vunpack.c.0.s8 %v1341
    %v1343 = vlaneseq
    %v1344 = vshrl.u32 %v1343, 7
    %v1345 = vsub.s32 %v1342, %v1344
    %v1346 = vrot.slane %v1338, %v1345
    %v1348 = vunpack.c.l.s4 1934713408
    %v1349 = vunpack.c.0.s8 %v1348
    %v1350 = vlaneseq
    %v1351 = vshrl.u32 %v1350, 7
    %v1352 = vsub.s32 %v1349, %v1351
    %v1353 = vrot.slane %v1339, %v1352
    %v1354 = vcombine.low %v1297, %v1313
    %v1356 = vunpack.c.l.s4 1934713408
    %v1357 = vunpack.c.0.s8 %v1356
    %v1358 = vlaneseq
    %v1359 = vshrl.u32 %v1358, 7
    %v1360 = vsub.s32 %v1357, %v1359
    %v1361 = vrot.slane %v1354, %v1360
    %v1362 = vcombine.low %v1322, %v1346
    %v1363 = vcombine.high %v1322, %v1346
    %v1364 = vcombine.low %v1329, %v1353
    %v1365 = vcombine.high %v1329, %v1353
    %v1366 = vcombine.low %v1337, %v1361
    %v1367 = vcombine.high %v1337, %v1361
    %v1370 = vpack.i.b16 %v1126, %v1008
    %v1371 = vshrl.u32 %v1008, 16
    %v1372 = vshrl.u32 %v1126, 16
    %v1373 = vpack.i.b16 %v1372, %v1371
    %v1376 = vpack.i.b16 %v1127, %v1009
    %v1377 = vshrl.u32 %v1009, 16
    %v1378 = vshrl.u32 %v1127, 16
    %v1379 = vpack.i.b16 %v1378, %v1377
    %v1382 = vpack.i.b16 %v1128, %v1010
    %v1383 = vshrl.u32 %v1010, 16
    %v1384 = vshrl.u32 %v1128, 16
    %v1385 = vpack.i.b16 %v1384, %v1383
    %v1388 = vpack.i.b16 %v1129, %v1011
    %v1389 = vshrl.u32 %v1011, 16
    %v1390 = vshrl.u32 %v1129, 16
    %v1391 = vpack.i.b16 %v1390, %v1389
    %v1394 = vpack.i.b16 %v1130, %v1012
    %v1396 = vshrl.u32 %v1012, 16
    %v1397 = vshrl.u32 %v1130, 16
    %v1398 = vpack.i.b16 %v1397, %v1396
    %v1402 = vpack.i.b16 %v1131, %v1013
    %v1404 = vshrl.u32 %v1013, 16
    %v1405 = vshrl.u32 %v1131, 16
    %v1406 = vpack.i.b16 %v1405, %v1404
    %v1410 = vpack.i.b16 %v1362, %v1244
    %v1411 = vshrl.u32 %v1244, 16
    %v1412 = vshrl.u32 %v1362, 16
    %v1413 = vpack.i.b16 %v1412, %v1411
    %v1416 = vpack.i.b16 %v1363, %v1245
    %v1417 = vshrl.u32 %v1245, 16
    %v1418 = vshrl.u32 %v1363, 16
    %v1419 = vpack.i.b16 %v1418, %v1417
    %v1422 = vpack.i.b16 %v1364, %v1246
    %v1423 = vshrl.u32 %v1246, 16
    %v1424 = vshrl.u32 %v1364, 16
    %v1425 = vpack.i.b16 %v1424, %v1423
    %v1428 = vpack.i.b16 %v1365, %v1247
    %v1429 = vshrl.u32 %v1247, 16
    %v1430 = vshrl.u32 %v1365, 16
    %v1431 = vpack.i.b16 %v1430, %v1429
    %v1434 = vpack.i.b16 %v1366, %v1248
    %v1436 = vshrl.u32 %v1248, 16
    %v1437 = vshrl.u32 %v1366, 16
    %v1438 = vpack.i.b16 %v1437, %v1436
    %v1442 = vpack.i.b16 %v1367, %v1249
    %v1444 = vshrl.u32 %v1249, 16
    %v1445 = vshrl.u32 %v1367, 16
    %v1446 = vpack.i.b16 %v1445, %v1444
    %vm1448 = vcmask 64512
    %v1450 = vsel %vm1448, %v1370, 0
    %v1453 = vsel %vm1448, %v1382, 0
    %1455 = vmatprep.subr.bf16.mxu0 0
    %1456 = vmatpush1.bf16.xpose.msra.mxu0 %v1453
    %1457 = vmatprep.subr.bf16.mxu0 0
    %1458 = vmatpush1.bf16.xpose.msra.mxu0 0
    %1459 = vmatprep.subr.bf16.mxu0 0
    %1460 = vmatpush1.bf16.xpose.msra.mxu0 0
    %1461 = vmatprep.subr.bf16.mxu0 0
    %1462 = vmatpush1.bf16.xpose.msra.mxu0 0
    %1463 = vmatprep.subr.bf16.mxu0 0
    %1464 = vmatpush1.bf16.xpose.msra.mxu0 0
    %1465 = vmatprep.subr.bf16.mxu0 0
    %1466 = vmatpush1.bf16.xpose.msra.mxu0 0
    %1467 = vmatprep.subr.bf16.mxu0 0
    %1468 = vmatpush1.bf16.xpose.msra.mxu0 0
    %1469 = vmatprep.subr.bf16.mxu0 0
    %1470 = vmatpush1.bf16.xpose.msra.mxu0 0
    %1471 = vmatprep.subr.bf16.mxu0 0
    %1472 = vmatpush1.bf16.xpose.msra.mxu0 0
    %1473 = vmatprep.subr.bf16.mxu0 0
    %1474 = vmatpush1.bf16.xpose.msra.mxu0 0
    %1475 = vmatprep.subr.bf16.mxu0 0
    %1476 = vmatpush1.bf16.xpose.msra.mxu0 0
    %1477 = vmatprep.subr.bf16.mxu0 0
    %1478 = vmatpush1.bf16.xpose.msra.mxu0 0
    %1479 = vmatprep.subr.bf16.mxu0 0
    %1480 = vmatpush1.bf16.xpose.msra.mxu0 0
    %1481 = vmatprep.subr.bf16.mxu0 0
    %1482 = vmatpush1.bf16.xpose.msra.mxu0 0
    %1483 = vmatprep.subr.bf16.mxu0 0
    %1484 = vmatpush1.bf16.xpose.msra.mxu0 0
    %1485 = vmatprep.subr.bf16.mxu0 0
    %1486 = vmatpush1.bf16.xpose.msra.mxu0 0
    %1487 = vmatprep.mubr.bf16.mxu0 0
    %1488 = vmatmul.mubr.bf16.gmra.mrb[0].mxu0 %v1450
    %v1489 = vpop.f32.mrb[0].mxu0
    %v1490 = vadd.f32 0.0, %v1489
    %v1491 = vpop.f32.mrb[0].mxu0
    %v1492 = vpop.f32.mrb[0].mxu0
    %v1493 = vadd.f32 0.0, %v1492
    %v1494 = vpop.f32.mrb[0].mxu0
    %1495 = vdwg.mxu0
    %v1497 = vsel %vm1448, %v1410, 0
    %v1500 = vsel %vm1448, %v1422, 0
    %1502 = vmatprep.subr.bf16.mxu0 0
    %1503 = vmatpush1.bf16.xpose.msra.mxu0 %v1500
    %1504 = vmatprep.subr.bf16.mxu0 0
    %1505 = vmatpush1.bf16.xpose.msra.mxu0 0
    %1506 = vmatprep.subr.bf16.mxu0 0
    %1507 = vmatpush1.bf16.xpose.msra.mxu0 0
    %1508 = vmatprep.subr.bf16.mxu0 0
    %1509 = vmatpush1.bf16.xpose.msra.mxu0 0
    %1510 = vmatprep.subr.bf16.mxu0 0
    %1511 = vmatpush1.bf16.xpose.msra.mxu0 0
    %1512 = vmatprep.subr.bf16.mxu0 0
    %1513 = vmatpush1.bf16.xpose.msra.mxu0 0
    %1514 = vmatprep.subr.bf16.mxu0 0
    %1515 = vmatpush1.bf16.xpose.msra.mxu0 0
    %1516 = vmatprep.subr.bf16.mxu0 0
    %1517 = vmatpush1.bf16.xpose.msra.mxu0 0
    %1518 = vmatprep.subr.bf16.mxu0 0
    %1519 = vmatpush1.bf16.xpose.msra.mxu0 0
    %1520 = vmatprep.subr.bf16.mxu0 0
    %1521 = vmatpush1.bf16.xpose.msra.mxu0 0
    %1522 = vmatprep.subr.bf16.mxu0 0
    %1523 = vmatpush1.bf16.xpose.msra.mxu0 0
    %1524 = vmatprep.subr.bf16.mxu0 0
    %1525 = vmatpush1.bf16.xpose.msra.mxu0 0
    %1526 = vmatprep.subr.bf16.mxu0 0
    %1527 = vmatpush1.bf16.xpose.msra.mxu0 0
    %1528 = vmatprep.subr.bf16.mxu0 0
    %1529 = vmatpush1.bf16.xpose.msra.mxu0 0
    %1530 = vmatprep.subr.bf16.mxu0 0
    %1531 = vmatpush1.bf16.xpose.msra.mxu0 0
    %1532 = vmatprep.subr.bf16.mxu0 0
    %1533 = vmatpush1.bf16.xpose.msra.mxu0 0
    %1534 = vmatprep.mubr.bf16.mxu0 0
    %1535 = vmatmul.mubr.bf16.gmra.mrb[0].mxu0 %v1497
    %v1536 = vpop.f32.mrb[0].mxu0
    %v1537 = vadd.f32 0.0, %v1536
    %v1538 = vpop.f32.mrb[0].mxu0
    %v1539 = vpop.f32.mrb[0].mxu0
    %v1540 = vadd.f32 0.0, %v1539
    %v1541 = vpop.f32.mrb[0].mxu0
    %1542 = vdwg.mxu0
    %v1544 = vsel %vm1448, %v1373, 0
    %v1547 = vsel %vm1448, %v1385, 0
    %1549 = vmatprep.subr.bf16.mxu0 0
    %1550 = vmatpush1.bf16.xpose.msra.mxu0 %v1547
    %1551 = vmatprep.subr.bf16.mxu0 0
    %1552 = vmatpush1.bf16.xpose.msra.mxu0 0
    %1553 = vmatprep.subr.bf16.mxu0 0
    %1554 = vmatpush1.bf16.xpose.msra.mxu0 0
    %1555 = vmatprep.subr.bf16.mxu0 0
    %1556 = vmatpush1.bf16.xpose.msra.mxu0 0
    %1557 = vmatprep.subr.bf16.mxu0 0
    %1558 = vmatpush1.bf16.xpose.msra.mxu0 0
    %1559 = vmatprep.subr.bf16.mxu0 0
    %1560 = vmatpush1.bf16.xpose.msra.mxu0 0
    %1561 = vmatprep.subr.bf16.mxu0 0
    %1562 = vmatpush1.bf16.xpose.msra.mxu0 0
    %1563 = vmatprep.subr.bf16.mxu0 0
    %1564 = vmatpush1.bf16.xpose.msra.mxu0 0
    %1565 = vmatprep.subr.bf16.mxu0 0
    %1566 = vmatpush1.bf16.xpose.msra.mxu0 0
    %1567 = vmatprep.subr.bf16.mxu0 0
    %1568 = vmatpush1.bf16.xpose.msra.mxu0 0
    %1569 = vmatprep.subr.bf16.mxu0 0
    %1570 = vmatpush1.bf16.xpose.msra.mxu0 0
    %1571 = vmatprep.subr.bf16.mxu0 0
    %1572 = vmatpush1.bf16.xpose.msra.mxu0 0
    %1573 = vmatprep.subr.bf16.mxu0 0
    %1574 = vmatpush1.bf16.xpose.msra.mxu0 0
    %1575 = vmatprep.subr.bf16.mxu0 0
    %1576 = vmatpush1.bf16.xpose.msra.mxu0 0
    %1577 = vmatprep.subr.bf16.mxu0 0
    %1578 = vmatpush1.bf16.xpose.msra.mxu0 0
    %1579 = vmatprep.subr.bf16.mxu0 0
    %1580 = vmatpush1.bf16.xpose.msra.mxu0 0
    %1581 = vmatprep.mubr.bf16.mxu0 0
    %1582 = vmatmul.mubr.bf16.gmra.mrb[0].mxu0 %v1544
    %v1583 = vpop.f32.mrb[0].mxu0
    %v1584 = vadd.f32 0.0, %v1583
    %v1585 = vpop.f32.mrb[0].mxu0
    %v1586 = vpop.f32.mrb[0].mxu0
    %v1587 = vadd.f32 0.0, %v1586
    %v1588 = vpop.f32.mrb[0].mxu0
    %1589 = vdwg.mxu0
    %v1591 = vsel %vm1448, %v1413, 0
    %v1594 = vsel %vm1448, %v1425, 0
    %1596 = vmatprep.subr.bf16.mxu0 0
    %1597 = vmatpush1.bf16.xpose.msra.mxu0 %v1594
    %1598 = vmatprep.subr.bf16.mxu0 0
    %1599 = vmatpush1.bf16.xpose.msra.mxu0 0
    %1600 = vmatprep.subr.bf16.mxu0 0
    %1601 = vmatpush1.bf16.xpose.msra.mxu0 0
    %1602 = vmatprep.subr.bf16.mxu0 0
    %1603 = vmatpush1.bf16.xpose.msra.mxu0 0
    %1604 = vmatprep.subr.bf16.mxu0 0
    %1605 = vmatpush1.bf16.xpose.msra.mxu0 0
    %1606 = vmatprep.subr.bf16.mxu0 0
    %1607 = vmatpush1.bf16.xpose.msra.mxu0 0
    %1608 = vmatprep.subr.bf16.mxu0 0
    %1609 = vmatpush1.bf16.xpose.msra.mxu0 0
    %1610 = vmatprep.subr.bf16.mxu0 0
    %1611 = vmatpush1.bf16.xpose.msra.mxu0 0
    %1612 = vmatprep.subr.bf16.mxu0 0
    %1613 = vmatpush1.bf16.xpose.msra.mxu0 0
    %1614 = vmatprep.subr.bf16.mxu0 0
    %1615 = vmatpush1.bf16.xpose.msra.mxu0 0
    %1616 = vmatprep.subr.bf16.mxu0 0
    %1617 = vmatpush1.bf16.xpose.msra.mxu0 0
    %1618 = vmatprep.subr.bf16.mxu0 0
    %1619 = vmatpush1.bf16.xpose.msra.mxu0 0
    %1620 = vmatprep.subr.bf16.mxu0 0
    %1621 = vmatpush1.bf16.xpose.msra.mxu0 0
    %1622 = vmatprep.subr.bf16.mxu0 0
    %1623 = vmatpush1.bf16.xpose.msra.mxu0 0
    %1624 = vmatprep.subr.bf16.mxu0 0
    %1625 = vmatpush1.bf16.xpose.msra.mxu0 0
    %1626 = vmatprep.subr.bf16.mxu0 0
    %1627 = vmatpush1.bf16.xpose.msra.mxu0 0
    %1628 = vmatprep.mubr.bf16.mxu0 0
    %1629 = vmatmul.mubr.bf16.gmra.mrb[0].mxu0 %v1591
    %v1630 = vpop.f32.mrb[0].mxu0
    %v1631 = vadd.f32 0.0, %v1630
    %v1632 = vpop.f32.mrb[0].mxu0
    %v1633 = vpop.f32.mrb[0].mxu0
    %v1634 = vadd.f32 0.0, %v1633
    %v1635 = vpop.f32.mrb[0].mxu0
    %1636 = vdwg.mxu0
    %v1638 = vsel %vm1448, %v1376, 0
    %v1641 = vsel %vm1448, %v1388, 0
    %1643 = vmatprep.subr.bf16.mxu0 0
    %1644 = vmatpush1.bf16.xpose.msra.mxu0 %v1641
    %1645 = vmatprep.subr.bf16.mxu0 0
    %1646 = vmatpush1.bf16.xpose.msra.mxu0 0
    %1647 = vmatprep.subr.bf16.mxu0 0
    %1648 = vmatpush1.bf16.xpose.msra.mxu0 0
    %1649 = vmatprep.subr.bf16.mxu0 0
    %1650 = vmatpush1.bf16.xpose.msra.mxu0 0
    %1651 = vmatprep.subr.bf16.mxu0 0
    %1652 = vmatpush1.bf16.xpose.msra.mxu0 0
    %1653 = vmatprep.subr.bf16.mxu0 0
    %1654 = vmatpush1.bf16.xpose.msra.mxu0 0
    %1655 = vmatprep.subr.bf16.mxu0 0
    %1656 = vmatpush1.bf16.xpose.msra.mxu0 0
    %1657 = vmatprep.subr.bf16.mxu0 0
    %1658 = vmatpush1.bf16.xpose.msra.mxu0 0
    %1659 = vmatprep.subr.bf16.mxu0 0
    %1660 = vmatpush1.bf16.xpose.msra.mxu0 0
    %1661 = vmatprep.subr.bf16.mxu0 0
    %1662 = vmatpush1.bf16.xpose.msra.mxu0 0
    %1663 = vmatprep.subr.bf16.mxu0 0
    %1664 = vmatpush1.bf16.xpose.msra.mxu0 0
    %1665 = vmatprep.subr.bf16.mxu0 0
    %1666 = vmatpush1.bf16.xpose.msra.mxu0 0
    %1667 = vmatprep.subr.bf16.mxu0 0
    %1668 = vmatpush1.bf16.xpose.msra.mxu0 0
    %1669 = vmatprep.subr.bf16.mxu0 0
    %1670 = vmatpush1.bf16.xpose.msra.mxu0 0
    %1671 = vmatprep.subr.bf16.mxu0 0
    %1672 = vmatpush1.bf16.xpose.msra.mxu0 0
    %1673 = vmatprep.subr.bf16.mxu0 0
    %1674 = vmatpush1.bf16.xpose.msra.mxu0 0
    %1675 = vmatprep.mubr.bf16.mxu0 0
    %1676 = vmatmul.mubr.bf16.gmra.mrb[0].mxu0 %v1638
    %v1677 = vpop.f32.mrb[0].mxu0
    %v1678 = vadd.f32 0.0, %v1677
    %v1679 = vpop.f32.mrb[0].mxu0
    %v1680 = vpop.f32.mrb[0].mxu0
    %v1681 = vadd.f32 0.0, %v1680
    %v1682 = vpop.f32.mrb[0].mxu0
    %1683 = vdwg.mxu0
    %v1685 = vsel %vm1448, %v1416, 0
    %v1688 = vsel %vm1448, %v1428, 0
    %1690 = vmatprep.subr.bf16.mxu0 0
    %1691 = vmatpush1.bf16.xpose.msra.mxu0 %v1688
    %1692 = vmatprep.subr.bf16.mxu0 0
    %1693 = vmatpush1.bf16.xpose.msra.mxu0 0
    %1694 = vmatprep.subr.bf16.mxu0 0
    %1695 = vmatpush1.bf16.xpose.msra.mxu0 0
    %1696 = vmatprep.subr.bf16.mxu0 0
    %1697 = vmatpush1.bf16.xpose.msra.mxu0 0
    %1698 = vmatprep.subr.bf16.mxu0 0
    %1699 = vmatpush1.bf16.xpose.msra.mxu0 0
    %1700 = vmatprep.subr.bf16.mxu0 0
    %1701 = vmatpush1.bf16.xpose.msra.mxu0 0
    %1702 = vmatprep.subr.bf16.mxu0 0
    %1703 = vmatpush1.bf16.xpose.msra.mxu0 0
    %1704 = vmatprep.subr.bf16.mxu0 0
    %1705 = vmatpush1.bf16.xpose.msra.mxu0 0
    %1706 = vmatprep.subr.bf16.mxu0 0
    %1707 = vmatpush1.bf16.xpose.msra.mxu0 0
    %1708 = vmatprep.subr.bf16.mxu0 0
    %1709 = vmatpush1.bf16.xpose.msra.mxu0 0
    %1710 = vmatprep.subr.bf16.mxu0 0
    %1711 = vmatpush1.bf16.xpose.msra.mxu0 0
    %1712 = vmatprep.subr.bf16.mxu0 0
    %1713 = vmatpush1.bf16.xpose.msra.mxu0 0
    %1714 = vmatprep.subr.bf16.mxu0 0
    %1715 = vmatpush1.bf16.xpose.msra.mxu0 0
    %1716 = vmatprep.subr.bf16.mxu0 0
    %1717 = vmatpush1.bf16.xpose.msra.mxu0 0
    %1718 = vmatprep.subr.bf16.mxu0 0
    %1719 = vmatpush1.bf16.xpose.msra.mxu0 0
    %1720 = vmatprep.subr.bf16.mxu0 0
    %1721 = vmatpush1.bf16.xpose.msra.mxu0 0
    %1722 = vmatprep.mubr.bf16.mxu0 0
    %1723 = vmatmul.mubr.bf16.gmra.mrb[0].mxu0 %v1685
    %v1724 = vpop.f32.mrb[0].mxu0
    %v1725 = vadd.f32 0.0, %v1724
    %v1726 = vpop.f32.mrb[0].mxu0
    %v1727 = vpop.f32.mrb[0].mxu0
    %v1728 = vadd.f32 0.0, %v1727
    %v1729 = vpop.f32.mrb[0].mxu0
    %1730 = vdwg.mxu0
    %v1732 = vsel %vm1448, %v1379, 0
    %v1735 = vsel %vm1448, %v1391, 0
    %1737 = vmatprep.subr.bf16.mxu0 0
    %1738 = vmatpush1.bf16.xpose.msra.mxu0 %v1735
    %1739 = vmatprep.subr.bf16.mxu0 0
    %1740 = vmatpush1.bf16.xpose.msra.mxu0 0
    %1741 = vmatprep.subr.bf16.mxu0 0
    %1742 = vmatpush1.bf16.xpose.msra.mxu0 0
    %1743 = vmatprep.subr.bf16.mxu0 0
    %1744 = vmatpush1.bf16.xpose.msra.mxu0 0
    %1745 = vmatprep.subr.bf16.mxu0 0
    %1746 = vmatpush1.bf16.xpose.msra.mxu0 0
    %1747 = vmatprep.subr.bf16.mxu0 0
    %1748 = vmatpush1.bf16.xpose.msra.mxu0 0
    %1749 = vmatprep.subr.bf16.mxu0 0
    %1750 = vmatpush1.bf16.xpose.msra.mxu0 0
    %1751 = vmatprep.subr.bf16.mxu0 0
    %1752 = vmatpush1.bf16.xpose.msra.mxu0 0
    %1753 = vmatprep.subr.bf16.mxu0 0
    %1754 = vmatpush1.bf16.xpose.msra.mxu0 0
    %1755 = vmatprep.subr.bf16.mxu0 0
    %1756 = vmatpush1.bf16.xpose.msra.mxu0 0
    %1757 = vmatprep.subr.bf16.mxu0 0
    %1758 = vmatpush1.bf16.xpose.msra.mxu0 0
    %1759 = vmatprep.subr.bf16.mxu0 0
    %1760 = vmatpush1.bf16.xpose.msra.mxu0 0
    %1761 = vmatprep.subr.bf16.mxu0 0
    %1762 = vmatpush1.bf16.xpose.msra.mxu0 0
    %1763 = vmatprep.subr.bf16.mxu0 0
    %1764 = vmatpush1.bf16.xpose.msra.mxu0 0
    %1765 = vmatprep.subr.bf16.mxu0 0
    %1766 = vmatpush1.bf16.xpose.msra.mxu0 0
    %1767 = vmatprep.subr.bf16.mxu0 0
    %1768 = vmatpush1.bf16.xpose.msra.mxu0 0
    %1769 = vmatprep.mubr.bf16.mxu0 0
    %1770 = vmatmul.mubr.bf16.gmra.mrb[0].mxu0 %v1732
    %v1771 = vpop.f32.mrb[0].mxu0
    %v1772 = vadd.f32 0.0, %v1771
    %v1773 = vpop.f32.mrb[0].mxu0
    %v1774 = vpop.f32.mrb[0].mxu0
    %v1775 = vadd.f32 0.0, %v1774
    %v1776 = vpop.f32.mrb[0].mxu0
    %1777 = vdwg.mxu0
    %v1779 = vsel %vm1448, %v1419, 0
    %v1782 = vsel %vm1448, %v1431, 0
    %1784 = vmatprep.subr.bf16.mxu0 0
    %1785 = vmatpush1.bf16.xpose.msra.mxu0 %v1782
    %1786 = vmatprep.subr.bf16.mxu0 0
    %1787 = vmatpush1.bf16.xpose.msra.mxu0 0
    %1788 = vmatprep.subr.bf16.mxu0 0
    %1789 = vmatpush1.bf16.xpose.msra.mxu0 0
    %1790 = vmatprep.subr.bf16.mxu0 0
    %1791 = vmatpush1.bf16.xpose.msra.mxu0 0
    %1792 = vmatprep.subr.bf16.mxu0 0
    %1793 = vmatpush1.bf16.xpose.msra.mxu0 0
    %1794 = vmatprep.subr.bf16.mxu0 0
    %1795 = vmatpush1.bf16.xpose.msra.mxu0 0
    %1796 = vmatprep.subr.bf16.mxu0 0
    %1797 = vmatpush1.bf16.xpose.msra.mxu0 0
    %1798 = vmatprep.subr.bf16.mxu0 0
    %1799 = vmatpush1.bf16.xpose.msra.mxu0 0
    %1800 = vmatprep.subr.bf16.mxu0 0
    %1801 = vmatpush1.bf16.xpose.msra.mxu0 0
    %1802 = vmatprep.subr.bf16.mxu0 0
    %1803 = vmatpush1.bf16.xpose.msra.mxu0 0
    %1804 = vmatprep.subr.bf16.mxu0 0
    %1805 = vmatpush1.bf16.xpose.msra.mxu0 0
    %1806 = vmatprep.subr.bf16.mxu0 0
    %1807 = vmatpush1.bf16.xpose.msra.mxu0 0
    %1808 = vmatprep.subr.bf16.mxu0 0
    %1809 = vmatpush1.bf16.xpose.msra.mxu0 0
    %1810 = vmatprep.subr.bf16.mxu0 0
    %1811 = vmatpush1.bf16.xpose.msra.mxu0 0
    %1812 = vmatprep.subr.bf16.mxu0 0
    %1813 = vmatpush1.bf16.xpose.msra.mxu0 0
    %1814 = vmatprep.subr.bf16.mxu0 0
    %1815 = vmatpush1.bf16.xpose.msra.mxu0 0
    %1816 = vmatprep.mubr.bf16.mxu0 0
    %1817 = vmatmul.mubr.bf16.gmra.mrb[0].mxu0 %v1779
    %v1818 = vpop.f32.mrb[0].mxu0
    %v1819 = vadd.f32 0.0, %v1818
    %v1820 = vpop.f32.mrb[0].mxu0
    %v1821 = vpop.f32.mrb[0].mxu0
    %v1822 = vadd.f32 0.0, %v1821
    %v1823 = vpop.f32.mrb[0].mxu0
    %1824 = vdwg.mxu0
    %vm1825 = vcmask 130048
    %v1826 = vsel %vm1825, %v1490, -inf
    %1827 = vmax.xlane.f32.xlu0 %v1826
    %v1828 = vpop.xlane.xlu0 %1827
    %v1829 = vsel %vm1825, %v1493, -inf
    %1830 = vmax.xlane.f32.xlu0 %v1829
    %v1831 = vpop.xlane.xlu0 %1830
    %v1832 = vsel %vm1825, %v1537, -inf
    %1833 = vmax.xlane.f32.xlu0 %v1832
    %v1834 = vpop.xlane.xlu0 %1833
    %v1835 = vsel %vm1825, %v1540, -inf
    %1836 = vmax.xlane.f32.xlu0 %v1835
    %v1837 = vpop.xlane.xlu0 %1836
    %v1838 = vsel %vm1825, %v1584, -inf
    %1839 = vmax.xlane.f32.xlu0 %v1838
    %v1840 = vpop.xlane.xlu0 %1839
    %v1841 = vsel %vm1825, %v1587, -inf
    %1842 = vmax.xlane.f32.xlu0 %v1841
    %v1843 = vpop.xlane.xlu0 %1842
    %v1844 = vsel %vm1825, %v1631, -inf
    %1845 = vmax.xlane.f32.xlu0 %v1844
    %v1846 = vpop.xlane.xlu0 %1845
    %v1847 = vsel %vm1825, %v1634, -inf
    %1848 = vmax.xlane.f32.xlu0 %v1847
    %v1849 = vpop.xlane.xlu0 %1848
    %v1850 = vsel %vm1825, %v1678, -inf
    %1851 = vmax.xlane.f32.xlu0 %v1850
    %v1852 = vpop.xlane.xlu0 %1851
    %v1853 = vsel %vm1825, %v1681, -inf
    %1854 = vmax.xlane.f32.xlu0 %v1853
    %v1855 = vpop.xlane.xlu0 %1854
    %v1856 = vsel %vm1825, %v1725, -inf
    %1857 = vmax.xlane.f32.xlu0 %v1856
    %v1858 = vpop.xlane.xlu0 %1857
    %v1859 = vsel %vm1825, %v1728, -inf
    %1860 = vmax.xlane.f32.xlu0 %v1859
    %v1861 = vpop.xlane.xlu0 %1860
    %v1862 = vsel %vm1825, %v1772, -inf
    %1863 = vmax.xlane.f32.xlu0 %v1862
    %v1864 = vpop.xlane.xlu0 %1863
    %v1865 = vsel %vm1825, %v1775, -inf
    %1866 = vmax.xlane.f32.xlu0 %v1865
    %v1867 = vpop.xlane.xlu0 %1866
    %v1868 = vsel %vm1825, %v1819, -inf
    %1869 = vmax.xlane.f32.xlu0 %v1868
    %v1870 = vpop.xlane.xlu0 %1869
    %v1871 = vsel %vm1825, %v1822, -inf
    %1872 = vmax.xlane.f32.xlu0 %v1871
    %v1873 = vpop.xlane.xlu0 %1872
    %v1874 = vsub.f32 %v1490, %v1828
    %v1875 = vsub.f32 %v1493, %v1831
    %v1876 = vsub.f32 %v1537, %v1834
    %v1877 = vsub.f32 %v1540, %v1837
    %v1878 = vsub.f32 %v1584, %v1840
    %v1879 = vsub.f32 %v1587, %v1843
    %v1880 = vsub.f32 %v1631, %v1846
    %v1881 = vsub.f32 %v1634, %v1849
    %v1882 = vsub.f32 %v1678, %v1852
    %v1883 = vsub.f32 %v1681, %v1855
    %v1884 = vsub.f32 %v1725, %v1858
    %v1885 = vsub.f32 %v1728, %v1861
    %v1886 = vsub.f32 %v1772, %v1864
    %v1887 = vsub.f32 %v1775, %v1867
    %v1888 = vsub.f32 %v1819, %v1870
    %v1889 = vsub.f32 %v1822, %v1873
    %v1890 = vmul.f32 %v1874, 1.442695
    %v1891 = vpow.pop %v1890
    %v1892 = vmul.f32 %v1875, 1.442695
    %v1893 = vpow.pop %v1892
    %v1894 = vmul.f32 %v1876, 1.442695
    %v1895 = vpow.pop %v1894
    %v1896 = vmul.f32 %v1877, 1.442695
    %v1897 = vpow.pop %v1896
    %v1898 = vmul.f32 %v1878, 1.442695
    %v1899 = vpow.pop %v1898
    %v1900 = vmul.f32 %v1879, 1.442695
    %v1901 = vpow.pop %v1900
    %v1902 = vmul.f32 %v1880, 1.442695
    %v1903 = vpow.pop %v1902
    %v1904 = vmul.f32 %v1881, 1.442695
    %v1905 = vpow.pop %v1904
    %v1906 = vmul.f32 %v1882, 1.442695
    %v1907 = vpow.pop %v1906
    %v1908 = vmul.f32 %v1883, 1.442695
    %v1909 = vpow.pop %v1908
    %v1910 = vmul.f32 %v1884, 1.442695
    %v1911 = vpow.pop %v1910
    %v1912 = vmul.f32 %v1885, 1.442695
    %v1913 = vpow.pop %v1912
    %v1914 = vmul.f32 %v1886, 1.442695
    %v1915 = vpow.pop %v1914
    %v1916 = vmul.f32 %v1887, 1.442695
    %v1917 = vpow.pop %v1916
    %v1918 = vmul.f32 %v1888, 1.442695
    %v1919 = vpow.pop %v1918
    %v1920 = vmul.f32 %v1889, 1.442695
    %v1921 = vpow.pop %v1920
    %v1922 = vsel %vm1825, %v1891, 0.0
    %1923 = vadd.xlane.f32.xlu0 %v1922
    %v1924 = vpop.xlane.xlu0 %1923
    %v1925 = vsel %vm1825, %v1893, 0.0
    %1926 = vadd.xlane.f32.xlu0 %v1925
    %v1927 = vpop.xlane.xlu0 %1926
    %v1928 = vsel %vm1825, %v1895, 0.0
    %1929 = vadd.xlane.f32.xlu0 %v1928
    %v1930 = vpop.xlane.xlu0 %1929
    %v1931 = vsel %vm1825, %v1897, 0.0
    %1932 = vadd.xlane.f32.xlu0 %v1931
    %v1933 = vpop.xlane.xlu0 %1932
    %v1934 = vsel %vm1825, %v1899, 0.0
    %1935 = vadd.xlane.f32.xlu0 %v1934
    %v1936 = vpop.xlane.xlu0 %1935
    %v1937 = vsel %vm1825, %v1901, 0.0
    %1938 = vadd.xlane.f32.xlu0 %v1937
    %v1939 = vpop.xlane.xlu0 %1938
    %v1940 = vsel %vm1825, %v1903, 0.0
    %1941 = vadd.xlane.f32.xlu0 %v1940
    %v1942 = vpop.xlane.xlu0 %1941
    %v1943 = vsel %vm1825, %v1905, 0.0
    %1944 = vadd.xlane.f32.xlu0 %v1943
    %v1945 = vpop.xlane.xlu0 %1944
    %v1946 = vsel %vm1825, %v1907, 0.0
    %1947 = vadd.xlane.f32.xlu0 %v1946
    %v1948 = vpop.xlane.xlu0 %1947
    %v1949 = vsel %vm1825, %v1909, 0.0
    %1950 = vadd.xlane.f32.xlu0 %v1949
    %v1951 = vpop.xlane.xlu0 %1950
    %v1952 = vsel %vm1825, %v1911, 0.0
    %1953 = vadd.xlane.f32.xlu0 %v1952
    %v1954 = vpop.xlane.xlu0 %1953
    %v1955 = vsel %vm1825, %v1913, 0.0
    %1956 = vadd.xlane.f32.xlu0 %v1955
    %v1957 = vpop.xlane.xlu0 %1956
    %v1958 = vsel %vm1825, %v1915, 0.0
    %1959 = vadd.xlane.f32.xlu0 %v1958
    %v1960 = vpop.xlane.xlu0 %1959
    %v1961 = vsel %vm1825, %v1917, 0.0
    %1962 = vadd.xlane.f32.xlu0 %v1961
    %v1963 = vpop.xlane.xlu0 %1962
    %v1964 = vsel %vm1825, %v1919, 0.0
    %1965 = vadd.xlane.f32.xlu0 %v1964
    %v1966 = vpop.xlane.xlu0 %1965
    %v1967 = vsel %vm1825, %v1921, 0.0
    %1968 = vadd.xlane.f32.xlu0 %v1967
    %v1969 = vpop.xlane.xlu0 %1968
    %v1970 = vrcp.pop %v1924
    %v1971 = vrcp.pop %v1927
    %v1972 = vrcp.pop %v1930
    %v1973 = vrcp.pop %v1933
    %v1974 = vrcp.pop %v1936
    %v1975 = vrcp.pop %v1939
    %v1976 = vrcp.pop %v1942
    %v1977 = vrcp.pop %v1945
    %v1978 = vrcp.pop %v1948
    %v1979 = vrcp.pop %v1951
    %v1980 = vrcp.pop %v1954
    %v1981 = vrcp.pop %v1957
    %v1982 = vrcp.pop %v1960
    %v1983 = vrcp.pop %v1963
    %v1984 = vrcp.pop %v1966
    %v1985 = vrcp.pop %v1969
    %v1986 = vmul.f32 %v1891, %v1970
    %v1987 = vmul.f32 %v1893, %v1971
    %v1988 = vmul.f32 %v1895, %v1972
    %v1989 = vmul.f32 %v1897, %v1973
    %v1990 = vmul.f32 %v1899, %v1974
    %v1991 = vmul.f32 %v1901, %v1975
    %v1992 = vmul.f32 %v1903, %v1976
    %v1993 = vmul.f32 %v1905, %v1977
    %v1994 = vmul.f32 %v1907, %v1978
    %v1995 = vmul.f32 %v1909, %v1979
    %v1996 = vmul.f32 %v1911, %v1980
    %v1997 = vmul.f32 %v1913, %v1981
    %v1998 = vmul.f32 %v1915, %v1982
    %v1999 = vmul.f32 %v1917, %v1983
    %v2000 = vmul.f32 %v1919, %v1984
    %v2001 = vmul.f32 %v1921, %v1985
    %v2002 = vpack.c.bf16 %v1987, %v1986
    %v2003 = vpack.c.bf16 %v1989, %v1988
    %v2004 = vpack.c.bf16 %v1991, %v1990
    %v2005 = vpack.c.bf16 %v1993, %v1992
    %v2006 = vpack.c.bf16 %v1995, %v1994
    %v2007 = vpack.c.bf16 %v1997, %v1996
    %v2008 = vpack.c.bf16 %v1999, %v1998
    %v2009 = vpack.c.bf16 %v2001, %v2000
    %v2011 = vsel %vm1825, %v2002, 0
    %2013 = vmatprep.subr.bf16.mxu0 0
    %2014 = vmatpush1.bf16.msra.mxu0 %v1394
    %2015 = vmatprep.subr.bf16.mxu0 0
    %2016 = vmatpush1.bf16.msra.mxu0 0
    %2017 = vmatprep.subr.bf16.mxu0 0
    %2018 = vmatpush1.bf16.msra.mxu0 0
    %2019 = vmatprep.subr.bf16.mxu0 0
    %2020 = vmatpush1.bf16.msra.mxu0 0
    %2021 = vmatprep.subr.bf16.mxu0 0
    %2022 = vmatpush1.bf16.msra.mxu0 0
    %2023 = vmatprep.subr.bf16.mxu0 0
    %2024 = vmatpush1.bf16.msra.mxu0 0
    %2025 = vmatprep.subr.bf16.mxu0 0
    %2026 = vmatpush1.bf16.msra.mxu0 0
    %2027 = vmatprep.subr.bf16.mxu0 0
    %2028 = vmatpush1.bf16.msra.mxu0 0
    %2029 = vmatprep.subr.bf16.mxu0 0
    %2030 = vmatpush1.bf16.msra.mxu0 0
    %2031 = vmatprep.subr.bf16.mxu0 0
    %2032 = vmatpush1.bf16.msra.mxu0 0
    %2033 = vmatprep.subr.bf16.mxu0 0
    %2034 = vmatpush1.bf16.msra.mxu0 0
    %2035 = vmatprep.subr.bf16.mxu0 0
    %2036 = vmatpush1.bf16.msra.mxu0 0
    %2037 = vmatprep.subr.bf16.mxu0 0
    %2038 = vmatpush1.bf16.msra.mxu0 0
    %2039 = vmatprep.subr.bf16.mxu0 0
    %2040 = vmatpush1.bf16.msra.mxu0 0
    %2041 = vmatprep.subr.bf16.mxu0 0
    %2042 = vmatpush1.bf16.msra.mxu0 0
    %2043 = vmatprep.subr.bf16.mxu0 0
    %2044 = vmatpush1.bf16.msra.mxu0 0
    %2045 = vmatprep.mubr.bf16.mxu0 0
    %2046 = vmatmul.mubr.bf16.gmra.mrb[0].mxu0 %v2011
    %v2047 = vpop.f32.mrb[0].mxu0
    %v2048 = vadd.f32 0.0, %v2047
    %v2049 = vpop.f32.mrb[0].mxu0
    %v2050 = vpop.f32.mrb[0].mxu0
    %v2051 = vadd.f32 0.0, %v2050
    %v2052 = vpop.f32.mrb[0].mxu0
    %2053 = vdwg.mxu0
    %v2055 = vsel %vm1825, %v2003, 0
    %2057 = vmatprep.subr.bf16.mxu0 0
    %2058 = vmatpush1.bf16.msra.mxu0 %v1434
    %2059 = vmatprep.subr.bf16.mxu0 0
    %2060 = vmatpush1.bf16.msra.mxu0 0
    %2061 = vmatprep.subr.bf16.mxu0 0
    %2062 = vmatpush1.bf16.msra.mxu0 0
    %2063 = vmatprep.subr.bf16.mxu0 0
    %2064 = vmatpush1.bf16.msra.mxu0 0
    %2065 = vmatprep.subr.bf16.mxu0 0
    %2066 = vmatpush1.bf16.msra.mxu0 0
    %2067 = vmatprep.subr.bf16.mxu0 0
    %2068 = vmatpush1.bf16.msra.mxu0 0
    %2069 = vmatprep.subr.bf16.mxu0 0
    %2070 = vmatpush1.bf16.msra.mxu0 0
    %2071 = vmatprep.subr.bf16.mxu0 0
    %2072 = vmatpush1.bf16.msra.mxu0 0
    %2073 = vmatprep.subr.bf16.mxu0 0
    %2074 = vmatpush1.bf16.msra.mxu0 0
    %2075 = vmatprep.subr.bf16.mxu0 0
    %2076 = vmatpush1.bf16.msra.mxu0 0
    %2077 = vmatprep.subr.bf16.mxu0 0
    %2078 = vmatpush1.bf16.msra.mxu0 0
    %2079 = vmatprep.subr.bf16.mxu0 0
    %2080 = vmatpush1.bf16.msra.mxu0 0
    %2081 = vmatprep.subr.bf16.mxu0 0
    %2082 = vmatpush1.bf16.msra.mxu0 0
    %2083 = vmatprep.subr.bf16.mxu0 0
    %2084 = vmatpush1.bf16.msra.mxu0 0
    %2085 = vmatprep.subr.bf16.mxu0 0
    %2086 = vmatpush1.bf16.msra.mxu0 0
    %2087 = vmatprep.subr.bf16.mxu0 0
    %2088 = vmatpush1.bf16.msra.mxu0 0
    %2089 = vmatprep.mubr.bf16.mxu0 0
    %2090 = vmatmul.mubr.bf16.gmra.mrb[0].mxu0 %v2055
    %v2091 = vpop.f32.mrb[0].mxu0
    %v2092 = vadd.f32 0.0, %v2091
    %v2093 = vpop.f32.mrb[0].mxu0
    %v2094 = vpop.f32.mrb[0].mxu0
    %v2095 = vadd.f32 0.0, %v2094
    %v2096 = vpop.f32.mrb[0].mxu0
    %2097 = vdwg.mxu0
    %v2099 = vsel %vm1825, %v2004, 0
    %2101 = vmatprep.subr.bf16.mxu0 0
    %2102 = vmatpush1.bf16.msra.mxu0 %v1398
    %2103 = vmatprep.subr.bf16.mxu0 0
    %2104 = vmatpush1.bf16.msra.mxu0 0
    %2105 = vmatprep.subr.bf16.mxu0 0
    %2106 = vmatpush1.bf16.msra.mxu0 0
    %2107 = vmatprep.subr.bf16.mxu0 0
    %2108 = vmatpush1.bf16.msra.mxu0 0
    %2109 = vmatprep.subr.bf16.mxu0 0
    %2110 = vmatpush1.bf16.msra.mxu0 0
    %2111 = vmatprep.subr.bf16.mxu0 0
    %2112 = vmatpush1.bf16.msra.mxu0 0
    %2113 = vmatprep.subr.bf16.mxu0 0
    %2114 = vmatpush1.bf16.msra.mxu0 0
    %2115 = vmatprep.subr.bf16.mxu0 0
    %2116 = vmatpush1.bf16.msra.mxu0 0
    %2117 = vmatprep.subr.bf16.mxu0 0
    %2118 = vmatpush1.bf16.msra.mxu0 0
    %2119 = vmatprep.subr.bf16.mxu0 0
    %2120 = vmatpush1.bf16.msra.mxu0 0
    %2121 = vmatprep.subr.bf16.mxu0 0
    %2122 = vmatpush1.bf16.msra.mxu0 0
    %2123 = vmatprep.subr.bf16.mxu0 0
    %2124 = vmatpush1.bf16.msra.mxu0 0
    %2125 = vmatprep.subr.bf16.mxu0 0
    %2126 = vmatpush1.bf16.msra.mxu0 0
    %2127 = vmatprep.subr.bf16.mxu0 0
    %2128 = vmatpush1.bf16.msra.mxu0 0
    %2129 = vmatprep.subr.bf16.mxu0 0
    %2130 = vmatpush1.bf16.msra.mxu0 0
    %2131 = vmatprep.subr.bf16.mxu0 0
    %2132 = vmatpush1.bf16.msra.mxu0 0
    %2133 = vmatprep.mubr.bf16.mxu0 0
    %2134 = vmatmul.mubr.bf16.gmra.mrb[0].mxu0 %v2099
    %v2135 = vpop.f32.mrb[0].mxu0
    %v2136 = vadd.f32 0.0, %v2135
    %v2137 = vpop.f32.mrb[0].mxu0
    %v2138 = vpop.f32.mrb[0].mxu0
    %v2139 = vadd.f32 0.0, %v2138
    %v2140 = vpop.f32.mrb[0].mxu0
    %2141 = vdwg.mxu0
    %v2143 = vsel %vm1825, %v2005, 0
    %2145 = vmatprep.subr.bf16.mxu0 0
    %2146 = vmatpush1.bf16.msra.mxu0 %v1438
    %2147 = vmatprep.subr.bf16.mxu0 0
    %2148 = vmatpush1.bf16.msra.mxu0 0
    %2149 = vmatprep.subr.bf16.mxu0 0
    %2150 = vmatpush1.bf16.msra.mxu0 0
    %2151 = vmatprep.subr.bf16.mxu0 0
    %2152 = vmatpush1.bf16.msra.mxu0 0
    %2153 = vmatprep.subr.bf16.mxu0 0
    %2154 = vmatpush1.bf16.msra.mxu0 0
    %2155 = vmatprep.subr.bf16.mxu0 0
    %2156 = vmatpush1.bf16.msra.mxu0 0
    %2157 = vmatprep.subr.bf16.mxu0 0
    %2158 = vmatpush1.bf16.msra.mxu0 0
    %2159 = vmatprep.subr.bf16.mxu0 0
    %2160 = vmatpush1.bf16.msra.mxu0 0
    %2161 = vmatprep.subr.bf16.mxu0 0
    %2162 = vmatpush1.bf16.msra.mxu0 0
    %2163 = vmatprep.subr.bf16.mxu0 0
    %2164 = vmatpush1.bf16.msra.mxu0 0
    %2165 = vmatprep.subr.bf16.mxu0 0
    %2166 = vmatpush1.bf16.msra.mxu0 0
    %2167 = vmatprep.subr.bf16.mxu0 0
    %2168 = vmatpush1.bf16.msra.mxu0 0
    %2169 = vmatprep.subr.bf16.mxu0 0
    %2170 = vmatpush1.bf16.msra.mxu0 0
    %2171 = vmatprep.subr.bf16.mxu0 0
    %2172 = vmatpush1.bf16.msra.mxu0 0
    %2173 = vmatprep.subr.bf16.mxu0 0
    %2174 = vmatpush1.bf16.msra.mxu0 0
    %2175 = vmatprep.subr.bf16.mxu0 0
    %2176 = vmatpush1.bf16.msra.mxu0 0
    %2177 = vmatprep.mubr.bf16.mxu0 0
    %2178 = vmatmul.mubr.bf16.gmra.mrb[0].mxu0 %v2143
    %v2179 = vpop.f32.mrb[0].mxu0
    %v2180 = vadd.f32 0.0, %v2179
    %v2181 = vpop.f32.mrb[0].mxu0
    %v2182 = vpop.f32.mrb[0].mxu0
    %v2183 = vadd.f32 0.0, %v2182
    %v2184 = vpop.f32.mrb[0].mxu0
    %2185 = vdwg.mxu0
    %v2187 = vsel %vm1825, %v2006, 0
    %2189 = vmatprep.subr.bf16.mxu0 0
    %2190 = vmatpush1.bf16.msra.mxu0 %v1402
    %2191 = vmatprep.subr.bf16.mxu0 0
    %2192 = vmatpush1.bf16.msra.mxu0 0
    %2193 = vmatprep.subr.bf16.mxu0 0
    %2194 = vmatpush1.bf16.msra.mxu0 0
    %2195 = vmatprep.subr.bf16.mxu0 0
    %2196 = vmatpush1.bf16.msra.mxu0 0
    %2197 = vmatprep.subr.bf16.mxu0 0
    %2198 = vmatpush1.bf16.msra.mxu0 0
    %2199 = vmatprep.subr.bf16.mxu0 0
    %2200 = vmatpush1.bf16.msra.mxu0 0
    %2201 = vmatprep.subr.bf16.mxu0 0
    %2202 = vmatpush1.bf16.msra.mxu0 0
    %2203 = vmatprep.subr.bf16.mxu0 0
    %2204 = vmatpush1.bf16.msra.mxu0 0
    %2205 = vmatprep.subr.bf16.mxu0 0
    %2206 = vmatpush1.bf16.msra.mxu0 0
    %2207 = vmatprep.subr.bf16.mxu0 0
    %2208 = vmatpush1.bf16.msra.mxu0 0
    %2209 = vmatprep.subr.bf16.mxu0 0
    %2210 = vmatpush1.bf16.msra.mxu0 0
    %2211 = vmatprep.subr.bf16.mxu0 0
    %2212 = vmatpush1.bf16.msra.mxu0 0
    %2213 = vmatprep.subr.bf16.mxu0 0
    %2214 = vmatpush1.bf16.msra.mxu0 0
    %2215 = vmatprep.subr.bf16.mxu0 0
    %2216 = vmatpush1.bf16.msra.mxu0 0
    %2217 = vmatprep.subr.bf16.mxu0 0
    %2218 = vmatpush1.bf16.msra.mxu0 0
    %2219 = vmatprep.subr.bf16.mxu0 0
    %2220 = vmatpush1.bf16.msra.mxu0 0
    %2221 = vmatprep.mubr.bf16.mxu0 0
    %2222 = vmatmul.mubr.bf16.gmra.mrb[0].mxu0 %v2187
    %v2223 = vpop.f32.mrb[0].mxu0
    %v2224 = vadd.f32 0.0, %v2223
    %v2225 = vpop.f32.mrb[0].mxu0
    %v2226 = vpop.f32.mrb[0].mxu0
    %v2227 = vadd.f32 0.0, %v2226
    %v2228 = vpop.f32.mrb[0].mxu0
    %2229 = vdwg.mxu0
    %v2231 = vsel %vm1825, %v2007, 0
    %2233 = vmatprep.subr.bf16.mxu0 0
    %2234 = vmatpush1.bf16.msra.mxu0 %v1442
    %2235 = vmatprep.subr.bf16.mxu0 0
    %2236 = vmatpush1.bf16.msra.mxu0 0
    %2237 = vmatprep.subr.bf16.mxu0 0
    %2238 = vmatpush1.bf16.msra.mxu0 0
    %2239 = vmatprep.subr.bf16.mxu0 0
    %2240 = vmatpush1.bf16.msra.mxu0 0
    %2241 = vmatprep.subr.bf16.mxu0 0
    %2242 = vmatpush1.bf16.msra.mxu0 0
    %2243 = vmatprep.subr.bf16.mxu0 0
    %2244 = vmatpush1.bf16.msra.mxu0 0
    %2245 = vmatprep.subr.bf16.mxu0 0
    %2246 = vmatpush1.bf16.msra.mxu0 0
    %2247 = vmatprep.subr.bf16.mxu0 0
    %2248 = vmatpush1.bf16.msra.mxu0 0
    %2249 = vmatprep.subr.bf16.mxu0 0
    %2250 = vmatpush1.bf16.msra.mxu0 0
    %2251 = vmatprep.subr.bf16.mxu0 0
    %2252 = vmatpush1.bf16.msra.mxu0 0
    %2253 = vmatprep.subr.bf16.mxu0 0
    %2254 = vmatpush1.bf16.msra.mxu0 0
    %2255 = vmatprep.subr.bf16.mxu0 0
    %2256 = vmatpush1.bf16.msra.mxu0 0
    %2257 = vmatprep.subr.bf16.mxu0 0
    %2258 = vmatpush1.bf16.msra.mxu0 0
    %2259 = vmatprep.subr.bf16.mxu0 0
    %2260 = vmatpush1.bf16.msra.mxu0 0
    %2261 = vmatprep.subr.bf16.mxu0 0
    %2262 = vmatpush1.bf16.msra.mxu0 0
    %2263 = vmatprep.subr.bf16.mxu0 0
    %2264 = vmatpush1.bf16.msra.mxu0 0
    %2265 = vmatprep.mubr.bf16.mxu0 0
    %2266 = vmatmul.mubr.bf16.gmra.mrb[0].mxu0 %v2231
    %v2267 = vpop.f32.mrb[0].mxu0
    %v2268 = vadd.f32 0.0, %v2267
    %v2269 = vpop.f32.mrb[0].mxu0
    %v2270 = vpop.f32.mrb[0].mxu0
    %v2271 = vadd.f32 0.0, %v2270
    %v2272 = vpop.f32.mrb[0].mxu0
    %2273 = vdwg.mxu0
    %v2275 = vsel %vm1825, %v2008, 0
    %2277 = vmatprep.subr.bf16.mxu0 0
    %2278 = vmatpush1.bf16.msra.mxu0 %v1406
    %2279 = vmatprep.subr.bf16.mxu0 0
    %2280 = vmatpush1.bf16.msra.mxu0 0
    %2281 = vmatprep.subr.bf16.mxu0 0
    %2282 = vmatpush1.bf16.msra.mxu0 0
    %2283 = vmatprep.subr.bf16.mxu0 0
    %2284 = vmatpush1.bf16.msra.mxu0 0
    %2285 = vmatprep.subr.bf16.mxu0 0
    %2286 = vmatpush1.bf16.msra.mxu0 0
    %2287 = vmatprep.subr.bf16.mxu0 0
    %2288 = vmatpush1.bf16.msra.mxu0 0
    %2289 = vmatprep.subr.bf16.mxu0 0
    %2290 = vmatpush1.bf16.msra.mxu0 0
    %2291 = vmatprep.subr.bf16.mxu0 0
    %2292 = vmatpush1.bf16.msra.mxu0 0
    %2293 = vmatprep.subr.bf16.mxu0 0
    %2294 = vmatpush1.bf16.msra.mxu0 0
    %2295 = vmatprep.subr.bf16.mxu0 0
    %2296 = vmatpush1.bf16.msra.mxu0 0
    %2297 = vmatprep.subr.bf16.mxu0 0
    %2298 = vmatpush1.bf16.msra.mxu0 0
    %2299 = vmatprep.subr.bf16.mxu0 0
    %2300 = vmatpush1.bf16.msra.mxu0 0
    %2301 = vmatprep.subr.bf16.mxu0 0
    %2302 = vmatpush1.bf16.msra.mxu0 0
    %2303 = vmatprep.subr.bf16.mxu0 0
    %2304 = vmatpush1.bf16.msra.mxu0 0
    %2305 = vmatprep.subr.bf16.mxu0 0
    %2306 = vmatpush1.bf16.msra.mxu0 0
    %2307 = vmatprep.subr.bf16.mxu0 0
    %2308 = vmatpush1.bf16.msra.mxu0 0
    %2309 = vmatprep.mubr.bf16.mxu0 0
    %2310 = vmatmul.mubr.bf16.gmra.mrb[0].mxu0 %v2275
    %v2311 = vpop.f32.mrb[0].mxu0
    %v2312 = vadd.f32 0.0, %v2311
    %v2313 = vpop.f32.mrb[0].mxu0
    %v2314 = vpop.f32.mrb[0].mxu0
    %v2315 = vadd.f32 0.0, %v2314
    %v2316 = vpop.f32.mrb[0].mxu0
    %2317 = vdwg.mxu0
    %v2319 = vsel %vm1825, %v2009, 0
    %2321 = vmatprep.subr.bf16.mxu0 0
    %2322 = vmatpush1.bf16.msra.mxu0 %v1446
    %2323 = vmatprep.subr.bf16.mxu0 0
    %2324 = vmatpush1.bf16.msra.mxu0 0
    %2325 = vmatprep.subr.bf16.mxu0 0
    %2326 = vmatpush1.bf16.msra.mxu0 0
    %2327 = vmatprep.subr.bf16.mxu0 0
    %2328 = vmatpush1.bf16.msra.mxu0 0
    %2329 = vmatprep.subr.bf16.mxu0 0
    %2330 = vmatpush1.bf16.msra.mxu0 0
    %2331 = vmatprep.subr.bf16.mxu0 0
    %2332 = vmatpush1.bf16.msra.mxu0 0
    %2333 = vmatprep.subr.bf16.mxu0 0
    %2334 = vmatpush1.bf16.msra.mxu0 0
    %2335 = vmatprep.subr.bf16.mxu0 0
    %2336 = vmatpush1.bf16.msra.mxu0 0
    %2337 = vmatprep.subr.bf16.mxu0 0
    %2338 = vmatpush1.bf16.msra.mxu0 0
    %2339 = vmatprep.subr.bf16.mxu0 0
    %2340 = vmatpush1.bf16.msra.mxu0 0
    %2341 = vmatprep.subr.bf16.mxu0 0
    %2342 = vmatpush1.bf16.msra.mxu0 0
    %2343 = vmatprep.subr.bf16.mxu0 0
    %2344 = vmatpush1.bf16.msra.mxu0 0
    %2345 = vmatprep.subr.bf16.mxu0 0
    %2346 = vmatpush1.bf16.msra.mxu0 0
    %2347 = vmatprep.subr.bf16.mxu0 0
    %2348 = vmatpush1.bf16.msra.mxu0 0
    %2349 = vmatprep.subr.bf16.mxu0 0
    %2350 = vmatpush1.bf16.msra.mxu0 0
    %2351 = vmatprep.subr.bf16.mxu0 0
    %2352 = vmatpush1.bf16.msra.mxu0 0
    %2353 = vmatprep.mubr.bf16.mxu0 0
    %2354 = vmatmul.mubr.bf16.gmra.mrb[0].mxu0 %v2319
    %v2355 = vpop.f32.mrb[0].mxu0
    %v2356 = vadd.f32 0.0, %v2355
    %v2357 = vpop.f32.mrb[0].mxu0
    %v2358 = vpop.f32.mrb[0].mxu0
    %v2359 = vadd.f32 0.0, %v2358
    %v2360 = vpop.f32.mrb[0].mxu0
    %2361 = vdwg.mxu0
    %v2362 = vcombine.low %v2048, %v2224
    %v2363 = vcombine.high %v2048, %v2224
    %v2365 = vunpack.c.l.s4 1983009808
    %v2366 = vunpack.c.0.s8 %v2365
    %v2367 = vlaneseq
    %v2368 = vshrl.u32 %v2367, 7
    %v2369 = vsub.s32 %v2366, %v2368
    %v2370 = vrot.slane %v2362, %v2369
    %v2372 = vunpack.c.l.s4 1983009808
    %v2373 = vunpack.c.0.s8 %v2372
    %v2374 = vlaneseq
    %v2375 = vshrl.u32 %v2374, 7
    %v2376 = vsub.s32 %v2373, %v2375
    %v2377 = vrot.slane %v2363, %v2376
    %v2378 = vcombine.low %v2136, %v2312
    %v2379 = vcombine.high %v2136, %v2312
    %v2381 = vunpack.c.l.s4 1983009808
    %v2382 = vunpack.c.0.s8 %v2381
    %v2383 = vlaneseq
    %v2384 = vshrl.u32 %v2383, 7
    %v2385 = vsub.s32 %v2382, %v2384
    %v2386 = vrot.slane %v2378, %v2385
    %v2388 = vunpack.c.l.s4 1983009808
    %v2389 = vunpack.c.0.s8 %v2388
    %v2390 = vlaneseq
    %v2391 = vshrl.u32 %v2390, 7
    %v2392 = vsub.s32 %v2389, %v2391
    %v2393 = vrot.slane %v2379, %v2392
    %v2394 = vcombine.low %v2370, %v2386
    %v2395 = vcombine.high %v2370, %v2386
    %v2397 = vunpack.c.l.s4 1934713408
    %v2398 = vunpack.c.0.s8 %v2397
    %v2399 = vlaneseq
    %v2400 = vshrl.u32 %v2399, 7
    %v2401 = vsub.s32 %v2398, %v2400
    %v2402 = vrot.slane %v2394, %v2401
    %v2404 = vunpack.c.l.s4 1934713408
    %v2405 = vunpack.c.0.s8 %v2404
    %v2406 = vlaneseq
    %v2407 = vshrl.u32 %v2406, 7
    %v2408 = vsub.s32 %v2405, %v2407
    %v2409 = vrot.slane %v2395, %v2408
    %v2410 = vcombine.low %v2377, %v2393
    %v2411 = vcombine.high %v2377, %v2393
    %v2413 = vunpack.c.l.s4 1934713408
    %v2414 = vunpack.c.0.s8 %v2413
    %v2415 = vlaneseq
    %v2416 = vshrl.u32 %v2415, 7
    %v2417 = vsub.s32 %v2414, %v2416
    %v2418 = vrot.slane %v2410, %v2417
    %v2420 = vunpack.c.l.s4 1934713408
    %v2421 = vunpack.c.0.s8 %v2420
    %v2422 = vlaneseq
    %v2423 = vshrl.u32 %v2422, 7
    %v2424 = vsub.s32 %v2421, %v2423
    %v2425 = vrot.slane %v2411, %v2424
    %v2426 = vcombine.high %v2402, 0.0
    %v2427 = vcombine.high %v2409, 0.0
    %v2428 = vcombine.high %v2418, 0.0
    %v2429 = vcombine.high %v2425, 0.0
    %v2430 = vcombine.low %v2051, %v2227
    %v2431 = vcombine.high %v2051, %v2227
    %v2433 = vunpack.c.l.s4 1983009808
    %v2434 = vunpack.c.0.s8 %v2433
    %v2435 = vlaneseq
    %v2436 = vshrl.u32 %v2435, 7
    %v2437 = vsub.s32 %v2434, %v2436
    %v2438 = vrot.slane %v2430, %v2437
    %v2440 = vunpack.c.l.s4 1983009808
    %v2441 = vunpack.c.0.s8 %v2440
    %v2442 = vlaneseq
    %v2443 = vshrl.u32 %v2442, 7
    %v2444 = vsub.s32 %v2441, %v2443
    %v2445 = vrot.slane %v2431, %v2444
    %v2446 = vcombine.low %v2139, %v2315
    %v2447 = vcombine.high %v2139, %v2315
    %v2449 = vunpack.c.l.s4 1983009808
    %v2450 = vunpack.c.0.s8 %v2449
    %v2451 = vlaneseq
    %v2452 = vshrl.u32 %v2451, 7
    %v2453 = vsub.s32 %v2450, %v2452
    %v2454 = vrot.slane %v2446, %v2453
    %v2456 = vunpack.c.l.s4 1983009808
    %v2457 = vunpack.c.0.s8 %v2456
    %v2458 = vlaneseq
    %v2459 = vshrl.u32 %v2458, 7
    %v2460 = vsub.s32 %v2457, %v2459
    %v2461 = vrot.slane %v2447, %v2460
    %v2462 = vcombine.low %v2438, %v2454
    %v2463 = vcombine.high %v2438, %v2454
    %v2465 = vunpack.c.l.s4 1934713408
    %v2466 = vunpack.c.0.s8 %v2465
    %v2467 = vlaneseq
    %v2468 = vshrl.u32 %v2467, 7
    %v2469 = vsub.s32 %v2466, %v2468
    %v2470 = vrot.slane %v2462, %v2469
    %v2472 = vunpack.c.l.s4 1934713408
    %v2473 = vunpack.c.0.s8 %v2472
    %v2474 = vlaneseq
    %v2475 = vshrl.u32 %v2474, 7
    %v2476 = vsub.s32 %v2473, %v2475
    %v2477 = vrot.slane %v2463, %v2476
    %v2478 = vcombine.low %v2445, %v2461
    %v2479 = vcombine.high %v2445, %v2461
    %v2481 = vunpack.c.l.s4 1934713408
    %v2482 = vunpack.c.0.s8 %v2481
    %v2483 = vlaneseq
    %v2484 = vshrl.u32 %v2483, 7
    %v2485 = vsub.s32 %v2482, %v2484
    %v2486 = vrot.slane %v2478, %v2485
    %v2488 = vunpack.c.l.s4 1934713408
    %v2489 = vunpack.c.0.s8 %v2488
    %v2490 = vlaneseq
    %v2491 = vshrl.u32 %v2490, 7
    %v2492 = vsub.s32 %v2489, %v2491
    %v2493 = vrot.slane %v2479, %v2492
    %v2494 = vcombine.high %v2470, 0.0
    %v2495 = vcombine.high %v2477, 0.0
    %v2496 = vcombine.high %v2486, 0.0
    %v2497 = vcombine.high %v2493, 0.0
    %v2498 = vcombine.low %v2092, %v2268
    %v2499 = vcombine.high %v2092, %v2268
    %v2501 = vunpack.c.l.s4 1983009808
    %v2502 = vunpack.c.0.s8 %v2501
    %v2503 = vlaneseq
    %v2504 = vshrl.u32 %v2503, 7
    %v2505 = vsub.s32 %v2502, %v2504
    %v2506 = vrot.slane %v2498, %v2505
    %v2508 = vunpack.c.l.s4 1983009808
    %v2509 = vunpack.c.0.s8 %v2508
    %v2510 = vlaneseq
    %v2511 = vshrl.u32 %v2510, 7
    %v2512 = vsub.s32 %v2509, %v2511
    %v2513 = vrot.slane %v2499, %v2512
    %v2514 = vcombine.low %v2180, %v2356
    %v2515 = vcombine.high %v2180, %v2356
    %v2517 = vunpack.c.l.s4 1983009808
    %v2518 = vunpack.c.0.s8 %v2517
    %v2519 = vlaneseq
    %v2520 = vshrl.u32 %v2519, 7
    %v2521 = vsub.s32 %v2518, %v2520
    %v2522 = vrot.slane %v2514, %v2521
    %v2524 = vunpack.c.l.s4 1983009808
    %v2525 = vunpack.c.0.s8 %v2524
    %v2526 = vlaneseq
    %v2527 = vshrl.u32 %v2526, 7
    %v2528 = vsub.s32 %v2525, %v2527
    %v2529 = vrot.slane %v2515, %v2528
    %v2530 = vcombine.low %v2506, %v2522
    %v2531 = vcombine.high %v2506, %v2522
    %v2533 = vunpack.c.l.s4 1934713408
    %v2534 = vunpack.c.0.s8 %v2533
    %v2535 = vlaneseq
    %v2536 = vshrl.u32 %v2535, 7
    %v2537 = vsub.s32 %v2534, %v2536
    %v2538 = vrot.slane %v2530, %v2537
    %v2540 = vunpack.c.l.s4 1934713408
    %v2541 = vunpack.c.0.s8 %v2540
    %v2542 = vlaneseq
    %v2543 = vshrl.u32 %v2542, 7
    %v2544 = vsub.s32 %v2541, %v2543
    %v2545 = vrot.slane %v2531, %v2544
    %v2546 = vcombine.low %v2513, %v2529
    %v2547 = vcombine.high %v2513, %v2529
    %v2549 = vunpack.c.l.s4 1934713408
    %v2550 = vunpack.c.0.s8 %v2549
    %v2551 = vlaneseq
    %v2552 = vshrl.u32 %v2551, 7
    %v2553 = vsub.s32 %v2550, %v2552
    %v2554 = vrot.slane %v2546, %v2553
    %v2556 = vunpack.c.l.s4 1934713408
    %v2557 = vunpack.c.0.s8 %v2556
    %v2558 = vlaneseq
    %v2559 = vshrl.u32 %v2558, 7
    %v2560 = vsub.s32 %v2557, %v2559
    %v2561 = vrot.slane %v2547, %v2560
    %v2562 = vcombine.high %v2538, 0.0
    %v2563 = vcombine.high %v2545, 0.0
    %v2564 = vcombine.high %v2554, 0.0
    %v2565 = vcombine.high %v2561, 0.0
    %v2566 = vcombine.low %v2095, %v2271
    %v2567 = vcombine.high %v2095, %v2271
    %v2569 = vunpack.c.l.s4 1983009808
    %v2570 = vunpack.c.0.s8 %v2569
    %v2571 = vlaneseq
    %v2572 = vshrl.u32 %v2571, 7
    %v2573 = vsub.s32 %v2570, %v2572
    %v2574 = vrot.slane %v2566, %v2573
    %v2576 = vunpack.c.l.s4 1983009808
    %v2577 = vunpack.c.0.s8 %v2576
    %v2578 = vlaneseq
    %v2579 = vshrl.u32 %v2578, 7
    %v2580 = vsub.s32 %v2577, %v2579
    %v2581 = vrot.slane %v2567, %v2580
    %v2582 = vcombine.low %v2183, %v2359
    %v2583 = vcombine.high %v2183, %v2359
    %v2585 = vunpack.c.l.s4 1983009808
    %v2586 = vunpack.c.0.s8 %v2585
    %v2587 = vlaneseq
    %v2588 = vshrl.u32 %v2587, 7
    %v2589 = vsub.s32 %v2586, %v2588
    %v2590 = vrot.slane %v2582, %v2589
    %v2592 = vunpack.c.l.s4 1983009808
    %v2593 = vunpack.c.0.s8 %v2592
    %v2594 = vlaneseq
    %v2595 = vshrl.u32 %v2594, 7
    %v2596 = vsub.s32 %v2593, %v2595
    %v2597 = vrot.slane %v2583, %v2596
    %v2598 = vcombine.low %v2574, %v2590
    %v2599 = vcombine.high %v2574, %v2590
    %v2601 = vunpack.c.l.s4 1934713408
    %v2602 = vunpack.c.0.s8 %v2601
    %v2603 = vlaneseq
    %v2604 = vshrl.u32 %v2603, 7
    %v2605 = vsub.s32 %v2602, %v2604
    %v2606 = vrot.slane %v2598, %v2605
    %v2608 = vunpack.c.l.s4 1934713408
    %v2609 = vunpack.c.0.s8 %v2608
    %v2610 = vlaneseq
    %v2611 = vshrl.u32 %v2610, 7
    %v2612 = vsub.s32 %v2609, %v2611
    %v2613 = vrot.slane %v2599, %v2612
    %v2614 = vcombine.low %v2581, %v2597
    %v2615 = vcombine.high %v2581, %v2597
    %v2617 = vunpack.c.l.s4 1934713408
    %v2618 = vunpack.c.0.s8 %v2617
    %v2619 = vlaneseq
    %v2620 = vshrl.u32 %v2619, 7
    %v2621 = vsub.s32 %v2618, %v2620
    %v2622 = vrot.slane %v2614, %v2621
    %v2624 = vunpack.c.l.s4 1934713408
    %v2625 = vunpack.c.0.s8 %v2624
    %v2626 = vlaneseq
    %v2627 = vshrl.u32 %v2626, 7
    %v2628 = vsub.s32 %v2625, %v2627
    %v2629 = vrot.slane %v2615, %v2628
    %v2630 = vcombine.high %v2606, 0.0
    %v2631 = vcombine.high %v2613, 0.0
    %v2632 = vcombine.high %v2622, 0.0
    %v2633 = vcombine.high %v2629, 0.0
    %v2634 = vcombine.low %v2402, %v2409
    %v2636 = vunpack.c.l.s4 1983009808
    %v2637 = vunpack.c.0.s8 %v2636
    %v2638 = vlaneseq
    %v2639 = vshrl.u32 %v2638, 7
    %v2640 = vsub.s32 %v2637, %v2639
    %v2641 = vrot.slane %v2634, %v2640
    %v2642 = vcombine.low %v2426, %v2427
    %v2644 = vunpack.c.l.s4 1983009808
    %v2645 = vunpack.c.0.s8 %v2644
    %v2646 = vlaneseq
    %v2647 = vshrl.u32 %v2646, 7
    %v2648 = vsub.s32 %v2645, %v2647
    %v2649 = vrot.slane %v2642, %v2648
    %v2650 = vcombine.low %v2418, %v2425
    %v2652 = vunpack.c.l.s4 1983009808
    %v2653 = vunpack.c.0.s8 %v2652
    %v2654 = vlaneseq
    %v2655 = vshrl.u32 %v2654, 7
    %v2656 = vsub.s32 %v2653, %v2655
    %v2657 = vrot.slane %v2650, %v2656
    %v2658 = vcombine.low %v2428, %v2429
    %v2660 = vunpack.c.l.s4 1983009808
    %v2661 = vunpack.c.0.s8 %v2660
    %v2662 = vlaneseq
    %v2663 = vshrl.u32 %v2662, 7
    %v2664 = vsub.s32 %v2661, %v2663
    %v2665 = vrot.slane %v2658, %v2664
    %v2666 = vcombine.low %v2641, %v2649
    %v2667 = vcombine.high %v2641, %v2649
    %v2669 = vunpack.c.l.s4 1934713408
    %v2670 = vunpack.c.0.s8 %v2669
    %v2671 = vlaneseq
    %v2672 = vshrl.u32 %v2671, 7
    %v2673 = vsub.s32 %v2670, %v2672
    %v2674 = vrot.slane %v2666, %v2673
    %v2676 = vunpack.c.l.s4 1934713408
    %v2677 = vunpack.c.0.s8 %v2676
    %v2678 = vlaneseq
    %v2679 = vshrl.u32 %v2678, 7
    %v2680 = vsub.s32 %v2677, %v2679
    %v2681 = vrot.slane %v2667, %v2680
    %v2682 = vcombine.low %v2657, %v2665
    %v2683 = vcombine.high %v2657, %v2665
    %v2685 = vunpack.c.l.s4 1934713408
    %v2686 = vunpack.c.0.s8 %v2685
    %v2687 = vlaneseq
    %v2688 = vshrl.u32 %v2687, 7
    %v2689 = vsub.s32 %v2686, %v2688
    %v2690 = vrot.slane %v2682, %v2689
    %v2692 = vunpack.c.l.s4 1934713408
    %v2693 = vunpack.c.0.s8 %v2692
    %v2694 = vlaneseq
    %v2695 = vshrl.u32 %v2694, 7
    %v2696 = vsub.s32 %v2693, %v2695
    %v2697 = vrot.slane %v2683, %v2696
    %v2698 = vcombine.low %v2674, %v2690
    %v2699 = vcombine.high %v2674, %v2690
    %v2700 = vcombine.low %v2681, %v2697
    %v2701 = vcombine.high %v2681, %v2697
    %v2702 = vcombine.low %v2470, %v2477
    %v2704 = vunpack.c.l.s4 1983009808
    %v2705 = vunpack.c.0.s8 %v2704
    %v2706 = vlaneseq
    %v2707 = vshrl.u32 %v2706, 7
    %v2708 = vsub.s32 %v2705, %v2707
    %v2709 = vrot.slane %v2702, %v2708
    %v2710 = vcombine.low %v2494, %v2495
    %v2712 = vunpack.c.l.s4 1983009808
    %v2713 = vunpack.c.0.s8 %v2712
    %v2714 = vlaneseq
    %v2715 = vshrl.u32 %v2714, 7
    %v2716 = vsub.s32 %v2713, %v2715
    %v2717 = vrot.slane %v2710, %v2716
    %v2718 = vcombine.low %v2486, %v2493
    %v2720 = vunpack.c.l.s4 1983009808
    %v2721 = vunpack.c.0.s8 %v2720
    %v2722 = vlaneseq
    %v2723 = vshrl.u32 %v2722, 7
    %v2724 = vsub.s32 %v2721, %v2723
    %v2725 = vrot.slane %v2718, %v2724
    %v2726 = vcombine.low %v2496, %v2497
    %v2728 = vunpack.c.l.s4 1983009808
    %v2729 = vunpack.c.0.s8 %v2728
    %v2730 = vlaneseq
    %v2731 = vshrl.u32 %v2730, 7
    %v2732 = vsub.s32 %v2729, %v2731
    %v2733 = vrot.slane %v2726, %v2732
    %v2734 = vcombine.low %v2709, %v2717
    %v2735 = vcombine.high %v2709, %v2717
    %v2737 = vunpack.c.l.s4 1934713408
    %v2738 = vunpack.c.0.s8 %v2737
    %v2739 = vlaneseq
    %v2740 = vshrl.u32 %v2739, 7
    %v2741 = vsub.s32 %v2738, %v2740
    %v2742 = vrot.slane %v2734, %v2741
    %v2744 = vunpack.c.l.s4 1934713408
    %v2745 = vunpack.c.0.s8 %v2744
    %v2746 = vlaneseq
    %v2747 = vshrl.u32 %v2746, 7
    %v2748 = vsub.s32 %v2745, %v2747
    %v2749 = vrot.slane %v2735, %v2748
    %v2750 = vcombine.low %v2725, %v2733
    %v2751 = vcombine.high %v2725, %v2733
    %v2753 = vunpack.c.l.s4 1934713408
    %v2754 = vunpack.c.0.s8 %v2753
    %v2755 = vlaneseq
    %v2756 = vshrl.u32 %v2755, 7
    %v2757 = vsub.s32 %v2754, %v2756
    %v2758 = vrot.slane %v2750, %v2757
    %v2760 = vunpack.c.l.s4 1934713408
    %v2761 = vunpack.c.0.s8 %v2760
    %v2762 = vlaneseq
    %v2763 = vshrl.u32 %v2762, 7
    %v2764 = vsub.s32 %v2761, %v2763
    %v2765 = vrot.slane %v2751, %v2764
    %v2766 = vcombine.low %v2742, %v2758
    %v2767 = vcombine.high %v2742, %v2758
    %v2768 = vcombine.low %v2749, %v2765
    %v2769 = vcombine.high %v2749, %v2765
    %v2770 = vcombine.low %v2538, %v2545
    %v2772 = vunpack.c.l.s4 1983009808
    %v2773 = vunpack.c.0.s8 %v2772
    %v2774 = vlaneseq
    %v2775 = vshrl.u32 %v2774, 7
    %v2776 = vsub.s32 %v2773, %v2775
    %v2777 = vrot.slane %v2770, %v2776
    %v2778 = vcombine.low %v2562, %v2563
    %v2780 = vunpack.c.l.s4 1983009808
    %v2781 = vunpack.c.0.s8 %v2780
    %v2782 = vlaneseq
    %v2783 = vshrl.u32 %v2782, 7
    %v2784 = vsub.s32 %v2781, %v2783
    %v2785 = vrot.slane %v2778, %v2784
    %v2786 = vcombine.low %v2554, %v2561
    %v2788 = vunpack.c.l.s4 1983009808
    %v2789 = vunpack.c.0.s8 %v2788
    %v2790 = vlaneseq
    %v2791 = vshrl.u32 %v2790, 7
    %v2792 = vsub.s32 %v2789, %v2791
    %v2793 = vrot.slane %v2786, %v2792
    %v2794 = vcombine.low %v2564, %v2565
    %v2796 = vunpack.c.l.s4 1983009808
    %v2797 = vunpack.c.0.s8 %v2796
    %v2798 = vlaneseq
    %v2799 = vshrl.u32 %v2798, 7
    %v2800 = vsub.s32 %v2797, %v2799
    %v2801 = vrot.slane %v2794, %v2800
    %v2802 = vcombine.low %v2777, %v2785
    %v2803 = vcombine.high %v2777, %v2785
    %v2805 = vunpack.c.l.s4 1934713408
    %v2806 = vunpack.c.0.s8 %v2805
    %v2807 = vlaneseq
    %v2808 = vshrl.u32 %v2807, 7
    %v2809 = vsub.s32 %v2806, %v2808
    %v2810 = vrot.slane %v2802, %v2809
    %v2812 = vunpack.c.l.s4 1934713408
    %v2813 = vunpack.c.0.s8 %v2812
    %v2814 = vlaneseq
    %v2815 = vshrl.u32 %v2814, 7
    %v2816 = vsub.s32 %v2813, %v2815
    %v2817 = vrot.slane %v2803, %v2816
    %v2818 = vcombine.low %v2793, %v2801
    %v2819 = vcombine.high %v2793, %v2801
    %v2821 = vunpack.c.l.s4 1934713408
    %v2822 = vunpack.c.0.s8 %v2821
    %v2823 = vlaneseq
    %v2824 = vshrl.u32 %v2823, 7
    %v2825 = vsub.s32 %v2822, %v2824
    %v2826 = vrot.slane %v2818, %v2825
    %v2828 = vunpack.c.l.s4 1934713408
    %v2829 = vunpack.c.0.s8 %v2828
    %v2830 = vlaneseq
    %v2831 = vshrl.u32 %v2830, 7
    %v2832 = vsub.s32 %v2829, %v2831
    %v2833 = vrot.slane %v2819, %v2832
    %v2834 = vcombine.low %v2810, %v2826
    %v2835 = vcombine.high %v2810, %v2826
    %v2836 = vcombine.low %v2817, %v2833
    %v2837 = vcombine.high %v2817, %v2833
    %v2838 = vcombine.low %v2606, %v2613
    %v2840 = vunpack.c.l.s4 1983009808
    %v2841 = vunpack.c.0.s8 %v2840
    %v2842 = vlaneseq
    %v2843 = vshrl.u32 %v2842, 7
    %v2844 = vsub.s32 %v2841, %v2843
    %v2845 = vrot.slane %v2838, %v2844
    %v2846 = vcombine.low %v2630, %v2631
    %v2848 = vunpack.c.l.s4 1983009808
    %v2849 = vunpack.c.0.s8 %v2848
    %v2850 = vlaneseq
    %v2851 = vshrl.u32 %v2850, 7
    %v2852 = vsub.s32 %v2849, %v2851
    %v2853 = vrot.slane %v2846, %v2852
    %v2854 = vcombine.low %v2622, %v2629
    %v2856 = vunpack.c.l.s4 1983009808
    %v2857 = vunpack.c.0.s8 %v2856
    %v2858 = vlaneseq
    %v2859 = vshrl.u32 %v2858, 7
    %v2860 = vsub.s32 %v2857, %v2859
    %v2861 = vrot.slane %v2854, %v2860
    %v2862 = vcombine.low %v2632, %v2633
    %v2864 = vunpack.c.l.s4 1983009808
    %v2865 = vunpack.c.0.s8 %v2864
    %v2866 = vlaneseq
    %v2867 = vshrl.u32 %v2866, 7
    %v2868 = vsub.s32 %v2865, %v2867
    %v2869 = vrot.slane %v2862, %v2868
    %v2870 = vcombine.low %v2845, %v2853
    %v2871 = vcombine.high %v2845, %v2853
    %v2873 = vunpack.c.l.s4 1934713408
    %v2874 = vunpack.c.0.s8 %v2873
    %v2875 = vlaneseq
    %v2876 = vshrl.u32 %v2875, 7
    %v2877 = vsub.s32 %v2874, %v2876
    %v2878 = vrot.slane %v2870, %v2877
    %v2880 = vunpack.c.l.s4 1934713408
    %v2881 = vunpack.c.0.s8 %v2880
    %v2882 = vlaneseq
    %v2883 = vshrl.u32 %v2882, 7
    %v2884 = vsub.s32 %v2881, %v2883
    %v2885 = vrot.slane %v2871, %v2884
    %v2886 = vcombine.low %v2861, %v2869
    %v2887 = vcombine.high %v2861, %v2869
    %v2889 = vunpack.c.l.s4 1934713408
    %v2890 = vunpack.c.0.s8 %v2889
    %v2891 = vlaneseq
    %v2892 = vshrl.u32 %v2891, 7
    %v2893 = vsub.s32 %v2890, %v2892
    %v2894 = vrot.slane %v2886, %v2893
    %v2896 = vunpack.c.l.s4 1934713408
    %v2897 = vunpack.c.0.s8 %v2896
    %v2898 = vlaneseq
    %v2899 = vshrl.u32 %v2898, 7
    %v2900 = vsub.s32 %v2897, %v2899
    %v2901 = vrot.slane %v2887, %v2900
    %v2902 = vcombine.low %v2878, %v2894
    %v2903 = vcombine.high %v2878, %v2894
    %v2904 = vcombine.low %v2885, %v2901
    %v2905 = vcombine.high %v2885, %v2901
    %2910 = vrot.lane.b32.xlu0 %v2699, 8
    %v2911 = vpop.permute.xlu0 %2910
    %2912 = vrot.lane.b32.xlu0 %v2767, 8
    %v2913 = vpop.permute.xlu0 %2912
    %2914 = vrot.lane.b32.xlu0 %v2835, 8
    %v2915 = vpop.permute.xlu0 %2914
    %2916 = vrot.lane.b32.xlu0 %v2903, 8
    %v2917 = vpop.permute.xlu0 %2916
    %2926 = vrot.lane.b32.xlu0 %v2700, 16
    %v2927 = vpop.permute.xlu0 %2926
    %2928 = vrot.lane.b32.xlu0 %v2768, 16
    %v2929 = vpop.permute.xlu0 %2928
    %2930 = vrot.lane.b32.xlu0 %v2836, 16
    %v2931 = vpop.permute.xlu0 %2930
    %2932 = vrot.lane.b32.xlu0 %v2904, 16
    %v2933 = vpop.permute.xlu0 %2932
    %2942 = vrot.lane.b32.xlu0 %v2701, 24
    %v2943 = vpop.permute.xlu0 %2942
    %2944 = vrot.lane.b32.xlu0 %v2769, 24
    %v2945 = vpop.permute.xlu0 %2944
    %2946 = vrot.lane.b32.xlu0 %v2837, 24
    %v2947 = vpop.permute.xlu0 %2946
    %2948 = vrot.lane.b32.xlu0 %v2905, 24
    %v2949 = vpop.permute.xlu0 %2948
    %v2954 = vsel %vm1448, %v2698, %v2911
    %v2955 = vsel %vm1448, %v2766, %v2913
    %v2956 = vsel %vm1448, %v2834, %v2915
    %v2957 = vsel %vm1448, %v2902, %v2917
    %v2958 = vsel %vm1825, %v2954, %v2927
    %v2959 = vsel %vm1825, %v2955, %v2929
    %v2960 = vsel %vm1825, %v2956, %v2931
    %v2961 = vsel %vm1825, %v2957, %v2933
    %vm2962 = vcmask 195584
    %v2963 = vsel %vm2962, %v2958, %v2943
    %v2964 = vsel %vm2962, %v2959, %v2945
    %v2965 = vsel %vm2962, %v2960, %v2947
    %v2966 = vsel %vm2962, %v2961, %v2949
    %v2967 = vadd.f32 %v2963, %v50
    %v2968 = vadd.f32 %v2964, %v51
    %v2969 = vadd.f32 %v2965, %v52
    %v2970 = vadd.f32 %v2966, %v53
    %2971 = vst.msk [vmem:[#allocation7] sm:$0xff] %vm54, %v2967
    %2972 = vst.msk [vmem:[#allocation7 + $0x8] sm:$0xff] %vm54, %v2968
    %2973 = vst.msk [vmem:[#allocation7 + $0x10] sm:$0xff] %vm54, %v2969
    %2974 = vst.msk [vmem:[#allocation7 + $0x18] sm:$0xff] %vm54, %v2970
    // Predicated region
    $region30: #{self_attn.1} parent=1 // pred_check
      _
    $region31: #{self_attn.1} parent=1 // pred_check_branch
      %2976 = sbr.rel (0) target = $region33
    $region32: #{self_attn.1} parent=1 // pred_region
      %s2978 = ssub.s32 512, 512
      %2979 = vsyncadd [#allocation4], %s2978
      %s2980 = sshll.u32 [#allocation7], 4
      %s2981 = int_to_ptr.vmem [resolvable:$true] %s2980
      %2986 = dma.vmem_to_hbm [thread:$0]  %s2981, 512, %s5, [#allocation4], 128, 128, 8
    $region33: #{self_attn.1} parent=1 // pred_fallthru
      _
    // Predicated region
    $region34: #{self_attn.1} parent=1 // pred_check
      _
    $region35: #{self_attn.1} parent=1 // pred_check_branch
      %2988 = sbr.rel (0) target = $region37
    $region36: #{self_attn.1} parent=1 // pred_region
      %2989 = dma.done [#allocation4], 512
    $region37: #{self_attn.1} parent=1 // pred_fallthru
      _
    %2990 = vsyncpa [#allocation3], 1
    %2991 = vsyncpa [#allocation6], 1
    %2992 = vsyncpa [#allocation4], 1

</llo_original>
